<compile_context>
chip_gen: v6e
topology: v6e:2x2x1
jax: 0.10.0
libtpu: 0.0.40
codegen_flags: <defaults>
</compile_context>

<pallas_src>
import jax
import jax.numpy as jnp
from jax.experimental import pallas as pl
from jax.experimental.pallas import tpu as pltpu


def _round_up(n, m):
    return ((n + m - 1) // m) * m


def fcn_kernel(x_ref, e_ref,
               w0x_ref, b0_ref,
               w1_ref, b1_ref,
               w2_ref, b2_ref,
               w3_ref, b3_ref,
               w4_ref, b4_ref,
               o_ref):
    bf16 = jnp.bfloat16
    f32 = jnp.float32

    # Layer 0: Linear(ch_in + t_dim -> 128) + ReLU6.
    # The time-embedding half of this matmul was precomputed in the wrapper
    # (e_ref row == emb[t] @ W0[ch_in:]); only the tiny x-part runs here.
    h = jnp.dot(x_ref[...], w0x_ref[...], preferred_element_type=f32)
    h = h + e_ref[...] + b0_ref[...]
    h = jnp.clip(h, 0.0, 6.0)

    # Layer 1: Linear(128 -> 256) + ReLU   (bf16 operands, f32 accumulation)
    h = jnp.dot(h.astype(bf16), w1_ref[...], preferred_element_type=f32) + b1_ref[...]
    h = jnp.maximum(h, 0.0)

    # Layer 2: Linear(256 -> 256) + ReLU
    h = jnp.dot(h.astype(bf16), w2_ref[...], preferred_element_type=f32) + b2_ref[...]
    h = jnp.maximum(h, 0.0)

    # Layer 3: Linear(256 -> 128) + ReLU
    h = jnp.dot(h.astype(bf16), w3_ref[...], preferred_element_type=f32) + b3_ref[...]
    h = jnp.maximum(h, 0.0)

    # Layer 4: Linear(128 -> ch_out), zero-padded to 128 output lanes.
    h = jnp.dot(h.astype(bf16), w4_ref[...], preferred_element_type=f32) + b4_ref[...]

    o_ref[...] = h.astype(o_ref.dtype)


def make_params(key, ch_in, ch_out, num_hidden, time_embedding_dim, num_embeddings):
    """Deterministic synthetic f32 parameters (shapes match the nn.Module)."""
    dims = [ch_in + time_embedding_dim] + list(num_hidden) + [ch_out]
    params = {}
    keys = jax.random.split(key, 2 * (len(dims) - 1) + 1)
    for i in range(len(dims) - 1):
        fan_in, fan_out = dims[i], dims[i + 1]
        scale = 1.0 / jnp.sqrt(jnp.float32(fan_in))
        # stored as (in, out) -> y = x @ W + b
        params[f"w{i}"] = scale * jax.random.normal(
            keys[2 * i], (fan_in, fan_out), dtype=jnp.float32)
        params[f"b{i}"] = scale * jax.random.normal(
            keys[2 * i + 1], (1, fan_out), dtype=jnp.float32)
    params["emb"] = jax.random.normal(
        keys[-1], (num_embeddings, time_embedding_dim), dtype=jnp.float32)
    return params


def prepare_params(params, ch_in, lane=128):
    """One-time prep: bf16 hidden weights, folded embedding projection,
    lane-padded output head. Call once, reuse across forward calls."""
    bf16, f32 = jnp.bfloat16, jnp.float32
    hi = jax.lax.Precision.HIGHEST
    w0 = params["w0"]
    kp = {
        "w0x": w0[:ch_in].astype(f32),        # tiny K=ch_in matmul stays f32
        "b0": params["b0"].astype(f32),
        # emb @ W0[ch_in:] : replaces embedding-gather + concat at run time.
        "emb_proj": jnp.dot(params["emb"], w0[ch_in:],
                            preferred_element_type=f32, precision=hi),
    }
    for i in (1, 2, 3):
        kp[f"w{i}"] = params[f"w{i}"].astype(bf16)
        kp[f"b{i}"] = params[f"b{i}"].astype(f32)
    ch_out = params["w4"].shape[1]
    n_pad = _round_up(max(ch_out, lane), lane)
    kp["w4"] = jnp.pad(params["w4"], ((0, 0), (0, n_pad - ch_out))).astype(bf16)
    kp["b4"] = jnp.pad(params["b4"], ((0, 0), (0, n_pad - ch_out))).astype(f32)
    kp["ch_out"] = ch_out
    return kp


def fcn_forward(x, t, kp, block_b=512):
    B, ch_in = x.shape
    h0 = kp["emb_proj"].shape[1]
    n_pad = kp["w4"].shape[1]
    ch_out = kp["ch_out"]

    # TODO(synk): the nn.Embedding row-gather stays in XLA (it indexes the
    # pre-projected table); an in-kernel scalar-prefetch gather is unnecessary
    # at these sizes.
    e = kp["emb_proj"][t].astype(jnp.float32)          # (B, 128) == emb[t] @ W0[ch_in:]

    # Batch tiling: pad B to a multiple of the tile (tile is a multiple of 128).
    tb = min(block_b, _round_up(B, 128))
    b_pad = _round_up(B, tb)
    if b_pad != B:
        x = jnp.pad(x, ((0, b_pad - B), (0, 0)))
        e = jnp.pad(e, ((0, b_pad - B), (0, 0)))
    x = x.astype(jnp.float32)

    weights = [kp["w0x"], kp["b0"], kp["w1"], kp["b1"], kp["w2"], kp["b2"],
               kp["w3"], kp["b3"], kp["w4"], kp["b4"]]

    flops = 2 * b_pad * sum(int(kp[k].shape[0]) * int(kp[k].shape[1])
                            for k in ("w0x", "w1", "w2", "w3", "w4"))
    bytes_accessed = int(
        x.size * x.dtype.itemsize + e.size * e.dtype.itemsize
        + sum(int(w.size) * w.dtype.itemsize for w in weights)
        + b_pad * n_pad * 4)

    # Constant index_map -> parameter arrays are fetched once and stay
    # VMEM-resident across all grid steps.
    def resident(arr):
        return pl.BlockSpec(arr.shape, lambda i: (0, 0))

    out = pl.pallas_call(
        fcn_kernel,
        out_shape=jax.ShapeDtypeStruct((b_pad, n_pad), jnp.float32),
        grid_spec=pltpu.PrefetchScalarGridSpec(
            num_scalar_prefetch=0,
            grid=(b_pad // tb,),
            in_specs=[pl.BlockSpec((tb, ch_in), lambda i: (i, 0)),   # x tile
                      pl.BlockSpec((tb, h0), lambda i: (i, 0))]      # emb rows
                     + [resident(w) for w in weights],
            out_specs=pl.BlockSpec((tb, n_pad), lambda i: (i, 0)),
        ),
        compiler_params=pltpu.CompilerParams(
            dimension_semantics=("parallel",),          # megacore on v7x
            vmem_limit_bytes=48 * 1024 * 1024),
        cost_estimate=pl.CostEstimate(flops=flops, transcendentals=0,
                                      bytes_accessed=bytes_accessed),
    )(x, e, *weights)

    return out[:B, :ch_out]


def fcn_reference(x, t, params, emulate_bf16=False):
    """Pure-JAX reference of the original module. With emulate_bf16=True the
    hidden/output matmul operands are rounded to bf16 (kernel numerics)."""
    f32 = jnp.float32
    hi = jax.lax.Precision.HIGHEST
    q = (lambda a: a.astype(jnp.bfloat16).astype(f32)) if emulate_bf16 else (lambda a: a)
    ch_in = x.shape[1]
    emb = params["emb"][t]
    w0 = params["w0"]
    h = (jnp.dot(x, w0[:ch_in], preferred_element_type=f32, precision=hi)
         + jnp.dot(emb, w0[ch_in:], preferred_element_type=f32, precision=hi)
         + params["b0"])
    h = jnp.clip(h, 0.0, 6.0)
    for i in (1, 2, 3):
        h = jnp.dot(q(h), q(params[f"w{i}"]),
                    preferred_element_type=f32, precision=hi) + params[f"b{i}"]
        h = jnp.maximum(h, 0.0)
    h = jnp.dot(q(h), q(params["w4"]),
                preferred_element_type=f32, precision=hi) + params["b4"]
    return h


if __name__ == "__main__":
    ch_in, ch_out = 4, 4
    num_hidden = [128, 256, 256, 128]
    time_embedding_dim = 20
    num_embeddings = 1000
    B = 2

    key = jax.random.PRNGKey(0)
    k_params, k_x, k_t = jax.random.split(key, 3)
    params = make_params(k_params, ch_in, ch_out, num_hidden,
                         time_embedding_dim, num_embeddings)
    kp = prepare_params(params, ch_in)

    x = jax.random.normal(k_x, (B, ch_in), dtype=jnp.float32)
    t = jax.random.randint(k_t, (B,), 0, num_embeddings, dtype=jnp.int32)

    out = jax.block_until_ready(fcn_forward(x, t, kp))
    assert out.shape == (B, ch_out)

    # Tight check against a reference mirroring the kernel's bf16-operand /
    # f32-accumulation numerics, plus a looser check against full-f32 semantics.
    ref_q = fcn_reference(x, t, params, emulate_bf16=True)
    assert jnp.allclose(out, ref_q, atol=1e-2, rtol=1e-2)
    ref = fcn_reference(x, t, params, emulate_bf16=False)
    assert jnp.allclose(out, ref, atol=1e-1, rtol=1e-1)

    print("KERNEL_OK")
</pallas_src>

<mosaic_0001>
module attributes {stable_mosaic.version = 11 : i64} {
  func.func @fcn_kernel(%arg0: i32, %arg1: memref<128x4xf32, #tpu.memory_space<vmem>>, %arg2: memref<128x128xf32, #tpu.memory_space<vmem>>, %arg3: memref<4x128xf32, #tpu.memory_space<vmem>>, %arg4: memref<1x128xf32, #tpu.memory_space<vmem>>, %arg5: memref<128x256xbf16, #tpu.memory_space<vmem>>, %arg6: memref<1x256xf32, #tpu.memory_space<vmem>>, %arg7: memref<256x256xbf16, #tpu.memory_space<vmem>>, %arg8: memref<1x256xf32, #tpu.memory_space<vmem>>, %arg9: memref<256x128xbf16, #tpu.memory_space<vmem>>, %arg10: memref<1x128xf32, #tpu.memory_space<vmem>>, %arg11: memref<128x128xbf16, #tpu.memory_space<vmem>>, %arg12: memref<1x128xf32, #tpu.memory_space<vmem>>, %arg13: memref<128x128xf32, #tpu.memory_space<vmem>>) attributes {dimension_semantics = [#tpu.dimension_semantics<parallel>], iteration_bounds = array<i64: 1>, scalar_prefetch = 0 : i64, scratch_operands = 0 : i64, tpu.core_type = #tpu.core_type<tc>, window_params = [{transform_indices = @transform_0, window_bounds = array<i64: 128, 4>}, {transform_indices = @transform_1, window_bounds = array<i64: 128, 128>}, {pipeline_mode = #tpu.pipeline_mode<synchronous>, transform_indices = @transform_2, window_bounds = array<i64: 4, 128>}, {pipeline_mode = #tpu.pipeline_mode<synchronous>, transform_indices = @transform_3, window_bounds = array<i64: 1, 128>}, {pipeline_mode = #tpu.pipeline_mode<synchronous>, transform_indices = @transform_4, window_bounds = array<i64: 128, 256>}, {pipeline_mode = #tpu.pipeline_mode<synchronous>, transform_indices = @transform_5, window_bounds = array<i64: 1, 256>}, {pipeline_mode = #tpu.pipeline_mode<synchronous>, transform_indices = @transform_6, window_bounds = array<i64: 256, 256>}, {pipeline_mode = #tpu.pipeline_mode<synchronous>, transform_indices = @transform_7, window_bounds = array<i64: 1, 256>}, {pipeline_mode = #tpu.pipeline_mode<synchronous>, transform_indices = @transform_8, window_bounds = array<i64: 256, 128>}, {pipeline_mode = #tpu.pipeline_mode<synchronous>, transform_indices = @transform_9, window_bounds = array<i64: 1, 128>}, {pipeline_mode = #tpu.pipeline_mode<synchronous>, transform_indices = @transform_10, window_bounds = array<i64: 128, 128>}, {pipeline_mode = #tpu.pipeline_mode<synchronous>, transform_indices = @transform_11, window_bounds = array<i64: 1, 128>}, {transform_indices = @transform_12, window_bounds = array<i64: 128, 128>}]} {
    %c0 = arith.constant 0 : index
    %c0_0 = arith.constant 0 : index
    %0 = vector.load %arg1[%c0, %c0_0] : memref<128x4xf32, #tpu.memory_space<vmem>>, vector<128x4xf32>
    %c0_1 = arith.constant 0 : index
    %c0_2 = arith.constant 0 : index
    %1 = vector.load %arg3[%c0_1, %c0_2] : memref<4x128xf32, #tpu.memory_space<vmem>>, vector<4x128xf32>
    %cst = arith.constant dense<0.000000e+00> : vector<128x128xf32>
    %2 = tpu.matmul %0, %1, %cst {dimension_numbers = #tpu.dot_dimension_numbers<[1], [0], [0], [1], [0, 0, 1, 1], [], []>} : vector<128x4xf32>, vector<4x128xf32>, vector<128x128xf32> -> vector<128x128xf32>
    %c0_3 = arith.constant 0 : index
    %c0_4 = arith.constant 0 : index
    %3 = vector.load %arg2[%c0_3, %c0_4] : memref<128x128xf32, #tpu.memory_space<vmem>>, vector<128x128xf32>
    %4 = arith.addf %2, %3 : vector<128x128xf32>
    %c0_5 = arith.constant 0 : index
    %c0_6 = arith.constant 0 : index
    %5 = vector.load %arg4[%c0_5, %c0_6] : memref<1x128xf32, #tpu.memory_space<vmem>>, vector<1x128xf32>
    %6 = vector.broadcast %5 : vector<1x128xf32> to vector<128x128xf32>
    %7 = arith.addf %4, %6 : vector<128x128xf32>
    %cst_7 = arith.constant 0.000000e+00 : f32
    %cst_8 = arith.constant 6.000000e+00 : f32
    %8 = vector.broadcast %cst_7 : f32 to vector<128x128xf32>
    %9 = arith.maximumf %8, %7 : vector<128x128xf32>
    %10 = vector.broadcast %cst_8 : f32 to vector<128x128xf32>
    %11 = arith.minimumf %10, %9 : vector<128x128xf32>
    %12 = arith.truncf %11 : vector<128x128xf32> to vector<128x128xbf16>
    %c0_9 = arith.constant 0 : index
    %c0_10 = arith.constant 0 : index
    %13 = vector.load %arg5[%c0_9, %c0_10] : memref<128x256xbf16, #tpu.memory_space<vmem>>, vector<128x256xbf16>
    %cst_11 = arith.constant dense<0.000000e+00> : vector<128x256xf32>
    %14 = tpu.matmul %12, %13, %cst_11 {dimension_numbers = #tpu.dot_dimension_numbers<[1], [0], [0], [1], [0, 0, 1, 1], [], []>} : vector<128x128xbf16>, vector<128x256xbf16>, vector<128x256xf32> -> vector<128x256xf32>
    %c0_12 = arith.constant 0 : index
    %c0_13 = arith.constant 0 : index
    %15 = vector.load %arg6[%c0_12, %c0_13] : memref<1x256xf32, #tpu.memory_space<vmem>>, vector<1x256xf32>
    %16 = vector.broadcast %15 : vector<1x256xf32> to vector<128x256xf32>
    %17 = arith.addf %14, %16 : vector<128x256xf32>
    %cst_14 = arith.constant 0.000000e+00 : f32
    %18 = vector.broadcast %cst_14 : f32 to vector<128x256xf32>
    %19 = arith.maximumf %17, %18 : vector<128x256xf32>
    %20 = arith.truncf %19 : vector<128x256xf32> to vector<128x256xbf16>
    %c0_15 = arith.constant 0 : index
    %c0_16 = arith.constant 0 : index
    %21 = vector.load %arg7[%c0_15, %c0_16] : memref<256x256xbf16, #tpu.memory_space<vmem>>, vector<256x256xbf16>
    %cst_17 = arith.constant dense<0.000000e+00> : vector<128x256xf32>
    %22 = tpu.matmul %20, %21, %cst_17 {dimension_numbers = #tpu.dot_dimension_numbers<[1], [0], [0], [1], [0, 0, 1, 1], [], []>} : vector<128x256xbf16>, vector<256x256xbf16>, vector<128x256xf32> -> vector<128x256xf32>
    %c0_18 = arith.constant 0 : index
    %c0_19 = arith.constant 0 : index
    %23 = vector.load %arg8[%c0_18, %c0_19] : memref<1x256xf32, #tpu.memory_space<vmem>>, vector<1x256xf32>
    %24 = vector.broadcast %23 : vector<1x256xf32> to vector<128x256xf32>
    %25 = arith.addf %22, %24 : vector<128x256xf32>
    %cst_20 = arith.constant 0.000000e+00 : f32
    %26 = vector.broadcast %cst_20 : f32 to vector<128x256xf32>
    %27 = arith.maximumf %25, %26 : vector<128x256xf32>
    %28 = arith.truncf %27 : vector<128x256xf32> to vector<128x256xbf16>
    %c0_21 = arith.constant 0 : index
    %c0_22 = arith.constant 0 : index
    %29 = vector.load %arg9[%c0_21, %c0_22] : memref<256x128xbf16, #tpu.memory_space<vmem>>, vector<256x128xbf16>
    %cst_23 = arith.constant dense<0.000000e+00> : vector<128x128xf32>
    %30 = tpu.matmul %28, %29, %cst_23 {dimension_numbers = #tpu.dot_dimension_numbers<[1], [0], [0], [1], [0, 0, 1, 1], [], []>} : vector<128x256xbf16>, vector<256x128xbf16>, vector<128x128xf32> -> vector<128x128xf32>
    %c0_24 = arith.constant 0 : index
    %c0_25 = arith.constant 0 : index
    %31 = vector.load %arg10[%c0_24, %c0_25] : memref<1x128xf32, #tpu.memory_space<vmem>>, vector<1x128xf32>
    %32 = vector.broadcast %31 : vector<1x128xf32> to vector<128x128xf32>
    %33 = arith.addf %30, %32 : vector<128x128xf32>
    %cst_26 = arith.constant 0.000000e+00 : f32
    %34 = vector.broadcast %cst_26 : f32 to vector<128x128xf32>
    %35 = arith.maximumf %33, %34 : vector<128x128xf32>
    %36 = arith.truncf %35 : vector<128x128xf32> to vector<128x128xbf16>
    %c0_27 = arith.constant 0 : index
    %c0_28 = arith.constant 0 : index
    %37 = vector.load %arg11[%c0_27, %c0_28] : memref<128x128xbf16, #tpu.memory_space<vmem>>, vector<128x128xbf16>
    %cst_29 = arith.constant dense<0.000000e+00> : vector<128x128xf32>
    %38 = tpu.matmul %36, %37, %cst_29 {dimension_numbers = #tpu.dot_dimension_numbers<[1], [0], [0], [1], [0, 0, 1, 1], [], []>} : vector<128x128xbf16>, vector<128x128xbf16>, vector<128x128xf32> -> vector<128x128xf32>
    %c0_30 = arith.constant 0 : index
    %c0_31 = arith.constant 0 : index
    %39 = vector.load %arg12[%c0_30, %c0_31] : memref<1x128xf32, #tpu.memory_space<vmem>>, vector<1x128xf32>
    %40 = vector.broadcast %39 : vector<1x128xf32> to vector<128x128xf32>
    %41 = arith.addf %38, %40 : vector<128x128xf32>
    %c0_32 = arith.constant 0 : index
    %c0_33 = arith.constant 0 : index
    %42 = vector.load %arg13[%c0_32, %c0_33] : memref<128x128xf32, #tpu.memory_space<vmem>>, vector<128x128xf32>
    tpu.vector_store %arg13[%c0_32, %c0_33], %41 {strides = array<i32>} : memref<128x128xf32, #tpu.memory_space<vmem>>, vector<128x128xf32>,
    return
  }
  func.func @transform_0(%arg0: i32) -> (i32, i32) {
    %c0_i32 = arith.constant 0 : i32
    %c0_i32_0 = arith.constant 0 : i32
    return %arg0, %c0_i32 : i32, i32
  }
  func.func @transform_1(%arg0: i32) -> (i32, i32) {
    %c0_i32 = arith.constant 0 : i32
    %c0_i32_0 = arith.constant 0 : i32
    return %arg0, %c0_i32 : i32, i32
  }
  func.func @transform_2(%arg0: i32) -> (i32, i32) {
    %c0_i32 = arith.constant 0 : i32
    %c0_i32_0 = arith.constant 0 : i32
    %c0_i32_1 = arith.constant 0 : i32
    return %c0_i32, %c0_i32_0 : i32, i32
  }
  func.func @transform_3(%arg0: i32) -> (i32, i32) {
    %c0_i32 = arith.constant 0 : i32
    %c0_i32_0 = arith.constant 0 : i32
    %c0_i32_1 = arith.constant 0 : i32
    return %c0_i32, %c0_i32_0 : i32, i32
  }
  func.func @transform_4(%arg0: i32) -> (i32, i32) {
    %c0_i32 = arith.constant 0 : i32
    %c0_i32_0 = arith.constant 0 : i32
    %c0_i32_1 = arith.constant 0 : i32
    return %c0_i32, %c0_i32_0 : i32, i32
  }
  func.func @transform_5(%arg0: i32) -> (i32, i32) {
    %c0_i32 = arith.constant 0 : i32
    %c0_i32_0 = arith.constant 0 : i32
    %c0_i32_1 = arith.constant 0 : i32
    return %c0_i32, %c0_i32_0 : i32, i32
  }
  func.func @transform_6(%arg0: i32) -> (i32, i32) {
    %c0_i32 = arith.constant 0 : i32
    %c0_i32_0 = arith.constant 0 : i32
    %c0_i32_1 = arith.constant 0 : i32
    return %c0_i32, %c0_i32_0 : i32, i32
  }
  func.func @transform_7(%arg0: i32) -> (i32, i32) {
    %c0_i32 = arith.constant 0 : i32
    %c0_i32_0 = arith.constant 0 : i32
    %c0_i32_1 = arith.constant 0 : i32
    return %c0_i32, %c0_i32_0 : i32, i32
  }
  func.func @transform_8(%arg0: i32) -> (i32, i32) {
    %c0_i32 = arith.constant 0 : i32
    %c0_i32_0 = arith.constant 0 : i32
    %c0_i32_1 = arith.constant 0 : i32
    return %c0_i32, %c0_i32_0 : i32, i32
  }
  func.func @transform_9(%arg0: i32) -> (i32, i32) {
    %c0_i32 = arith.constant 0 : i32
    %c0_i32_0 = arith.constant 0 : i32
    %c0_i32_1 = arith.constant 0 : i32
    return %c0_i32, %c0_i32_0 : i32, i32
  }
  func.func @transform_10(%arg0: i32) -> (i32, i32) {
    %c0_i32 = arith.constant 0 : i32
    %c0_i32_0 = arith.constant 0 : i32
    %c0_i32_1 = arith.constant 0 : i32
    return %c0_i32, %c0_i32_0 : i32, i32
  }
  func.func @transform_11(%arg0: i32) -> (i32, i32) {
    %c0_i32 = arith.constant 0 : i32
    %c0_i32_0 = arith.constant 0 : i32
    %c0_i32_1 = arith.constant 0 : i32
    return %c0_i32, %c0_i32_0 : i32, i32
  }
  func.func @transform_12(%arg0: i32) -> (i32, i32) {
    %c0_i32 = arith.constant 0 : i32
    %c0_i32_0 = arith.constant 0 : i32
    return %arg0, %c0_i32 : i32, i32
  }
}

</mosaic_0001>

<llo_original>
// kernel: tpu_custom_call.1
$region0: #{tpu_custom_call.1}
  #allocation0 [shape = 'u32[]', space=smem, size = 0x4, offset = 0x4, fixed_abs, tag = 'smem constant byte address 0x4 - core index']
  #allocation1 [shape = 'u32[144,128]{1,0:T(1,128)}', space=vmem, size = 0x12000, scoped, tag = 'internal scratch']
  %s0 = inlined_call_operand.vmem [shape: f32[128,4], index: 0, kind: input, shape index: {}]
  %s1 = inlined_call_operand.vmem [shape: f32[128,128], index: 1, kind: input, shape index: {}]
  %s2 = inlined_call_operand.vmem [shape: f32[4,128], index: 2, kind: input, shape index: {}]
  %s3 = inlined_call_operand.vmem [shape: f32[1,128], index: 3, kind: input, shape index: {}]
  %s4 = inlined_call_operand.hbm [shape: bf16[128,256], index: 4, kind: input, shape index: {}]
  %s5 = inlined_call_operand.vmem [shape: f32[1,256], index: 5, kind: input, shape index: {}]
  %s6 = inlined_call_operand.hbm [shape: bf16[256,256], index: 6, kind: input, shape index: {}]
  %s7 = inlined_call_operand.vmem [shape: f32[1,256], index: 7, kind: input, shape index: {}]
  %s8 = inlined_call_operand.hbm [shape: bf16[256,128], index: 8, kind: input, shape index: {}]
  %s9 = inlined_call_operand.vmem [shape: f32[1,128], index: 9, kind: input, shape index: {}]
  %s10 = inlined_call_operand.hbm [shape: bf16[128,128], index: 10, kind: input, shape index: {}]
  %s11 = inlined_call_operand.vmem [shape: f32[1,128], index: 11, kind: input, shape index: {}]
  %s12 = inlined_call_operand.hbm [shape: f32[128,128], index: 12, kind: output, shape index: {}]
  %s13 = sld [smem:[#allocation0]]
  $region74: #{tpu_custom_call.1} parent=0
    _
  %s15 = ssub.s32 1, %s13
  %s16 = scalar_select 0, %s15, %s13
  $region1: #{tpu_custom_call.1} parent=0
    #allocation2 [shape = 'u8[65536]{0}', space=vmem, size = 0x10000, scoped, tag = 'input window, operand 4, single buffered']
    #allocation3 [shape = 's32[1]{0}', space=sflag, size = 0x4, scoped, tag = 'scoped memory for tpu_custom_call.1']
    #allocation4 [shape = 's32[1]{0}', space=sflag, size = 0x4, scoped, tag = 'scoped memory for tpu_custom_call.1']
    #allocation5 [shape = 'u8[131072]{0}', space=vmem, size = 0x20000, scoped, tag = 'input window, operand 6, single buffered']
    #allocation6 [shape = 's32[1]{0}', space=sflag, size = 0x4, scoped, tag = 'scoped memory for tpu_custom_call.1']
    #allocation7 [shape = 'u8[65536]{0}', space=vmem, size = 0x10000, scoped, tag = 'input window, operand 8, single buffered']
    #allocation8 [shape = 'u8[32768]{0}', space=vmem, size = 0x8000, scoped, tag = 'input window, operand 10, single buffered']
    #allocation9 [shape = 's32[1]{0}', space=sflag, size = 0x4, scoped, tag = 'scoped memory for tpu_custom_call.1']
    #allocation10 [shape = 'u8[65536]{0}', space=vmem, size = 0x10000, scoped, tag = 'output window, operand 0, single buffered']
    %17 = vsyncpa [#allocation3], 0
    %18 = vsyncpa [#allocation6], 0
    %19 = vsyncpa [#allocation9], 0
    %20 = vsyncpa [#allocation4], 0
    // Predicated region
    $region2: #{tpu_custom_call.1} parent=1 // pred_check
      _
    $region3: #{tpu_custom_call.1} parent=1 // pred_check_branch
      %22 = sbr.rel (0) target = $region5
    $region4: #{tpu_custom_call.1} parent=1 // pred_region
      _
    $region5: #{tpu_custom_call.1} parent=1 // pred_fallthru
      _
    // Predicated region
    $region6: #{tpu_custom_call.1} parent=1 // pred_check
      _
    $region7: #{tpu_custom_call.1} parent=1 // pred_check_branch
      %24 = sbr.rel (0) target = $region9
    $region8: #{tpu_custom_call.1} parent=1 // pred_region
      _
    $region9: #{tpu_custom_call.1} parent=1 // pred_fallthru
      _
    // Predicated region
    $region10: #{tpu_custom_call.1} parent=1 // pred_check
      _
    $region11: #{tpu_custom_call.1} parent=1 // pred_check_branch
      %26 = sbr.rel (0) target = $region13
    $region12: #{tpu_custom_call.1} parent=1 // pred_region
      _
    $region13: #{tpu_custom_call.1} parent=1 // pred_fallthru
      _
    // Predicated region
    $region14: #{tpu_custom_call.1} parent=1 // pred_check
      _
    $region15: #{tpu_custom_call.1} parent=1 // pred_check_branch
      %28 = sbr.rel (0) target = $region17
    $region16: #{tpu_custom_call.1} parent=1 // pred_region
      _
    $region17: #{tpu_custom_call.1} parent=1 // pred_fallthru
      _
    // Predicated region
    $region18: #{tpu_custom_call.1} parent=1 // pred_check
      _
    $region19: #{tpu_custom_call.1} parent=1 // pred_check_branch
      %30 = sbr.rel (0) target = $region21
    $region20: #{tpu_custom_call.1} parent=1 // pred_region
      %s32 = ssub.s32 2048, 2048
      %33 = vsyncadd [#allocation3], %s32
      %s34 = sshll.u32 [#allocation2], 4
      %s35 = int_to_ptr.vmem [resolvable:$true] %s34
      %40 = dma.hbm_to_vmem [thread:$0]  %s4, 2048, %s35, [#allocation3], 128, 128, 8
    $region21: #{tpu_custom_call.1} parent=1 // pred_fallthru
      _
    // Predicated region
    $region22: #{tpu_custom_call.1} parent=1 // pred_check
      _
    $region23: #{tpu_custom_call.1} parent=1 // pred_check_branch
      %42 = sbr.rel (0) target = $region25
    $region24: #{tpu_custom_call.1} parent=1 // pred_region
      _
    $region25: #{tpu_custom_call.1} parent=1 // pred_fallthru
      _
    // Predicated region
    $region26: #{tpu_custom_call.1} parent=1 // pred_check
      _
    $region27: #{tpu_custom_call.1} parent=1 // pred_check_branch
      %44 = sbr.rel (0) target = $region29
    $region28: #{tpu_custom_call.1} parent=1 // pred_region
      %s46 = ssub.s32 4096, 4096
      %47 = vsyncadd [#allocation6], %s46
      %s48 = sshll.u32 [#allocation5], 4
      %s49 = int_to_ptr.vmem [resolvable:$true] %s48
      %54 = dma.hbm_to_vmem [thread:$0]  %s6, 4096, %s49, [#allocation6], 128, 128, 8
    $region29: #{tpu_custom_call.1} parent=1 // pred_fallthru
      _
    // Predicated region
    $region30: #{tpu_custom_call.1} parent=1 // pred_check
      _
    $region31: #{tpu_custom_call.1} parent=1 // pred_check_branch
      %56 = sbr.rel (0) target = $region33
    $region32: #{tpu_custom_call.1} parent=1 // pred_region
      _
    $region33: #{tpu_custom_call.1} parent=1 // pred_fallthru
      _
    // Predicated region
    $region34: #{tpu_custom_call.1} parent=1 // pred_check
      _
    $region35: #{tpu_custom_call.1} parent=1 // pred_check_branch
      %58 = sbr.rel (0) target = $region37
    $region36: #{tpu_custom_call.1} parent=1 // pred_region
      %s60 = ssub.s32 2048, 2048
      %61 = vsyncadd [#allocation6], %s60
      %s62 = sshll.u32 [#allocation7], 4
      %s63 = int_to_ptr.vmem [resolvable:$true] %s62
      %68 = dma.hbm_to_vmem [thread:$0]  %s8, 2048, %s63, [#allocation6], 64, 64, 4
    $region37: #{tpu_custom_call.1} parent=1 // pred_fallthru
      _
    // Predicated region
    $region38: #{tpu_custom_call.1} parent=1 // pred_check
      _
    $region39: #{tpu_custom_call.1} parent=1 // pred_check_branch
      %70 = sbr.rel (0) target = $region41
    $region40: #{tpu_custom_call.1} parent=1 // pred_region
      _
    $region41: #{tpu_custom_call.1} parent=1 // pred_fallthru
      _
    // Predicated region
    $region42: #{tpu_custom_call.1} parent=1 // pred_check
      _
    $region43: #{tpu_custom_call.1} parent=1 // pred_check_branch
      %72 = sbr.rel (0) target = $region45
    $region44: #{tpu_custom_call.1} parent=1 // pred_region
      %s74 = ssub.s32 1024, 1024
      %75 = vsyncadd [#allocation9], %s74
      %s76 = sshll.u32 [#allocation8], 4
      %s77 = int_to_ptr.vmem [resolvable:$true] %s76
      %82 = dma.hbm_to_vmem [thread:$0]  %s10, 1024, %s77, [#allocation9], 64, 64, 4
    $region45: #{tpu_custom_call.1} parent=1 // pred_fallthru
      _
    // Predicated region
    $region46: #{tpu_custom_call.1} parent=1 // pred_check
      _
    $region47: #{tpu_custom_call.1} parent=1 // pred_check_branch
      %84 = sbr.rel (0) target = $region49
    $region48: #{tpu_custom_call.1} parent=1 // pred_region
      _
    $region49: #{tpu_custom_call.1} parent=1 // pred_fallthru
      _
    // Predicated region
    $region50: #{tpu_custom_call.1} parent=1 // pred_check
      _
    $region51: #{tpu_custom_call.1} parent=1 // pred_check_branch
      %86 = sbr.rel (0) target = $region53
    $region52: #{tpu_custom_call.1} parent=1 // pred_region
      %87 = dma.done [#allocation3], 2048
    $region53: #{tpu_custom_call.1} parent=1 // pred_fallthru
      _
    // Predicated region
    $region54: #{tpu_custom_call.1} parent=1 // pred_check
      _
    $region55: #{tpu_custom_call.1} parent=1 // pred_check_branch
      %89 = sbr.rel (0) target = $region57
    $region56: #{tpu_custom_call.1} parent=1 // pred_region
      %90 = dma.done [#allocation6], 4096
    $region57: #{tpu_custom_call.1} parent=1 // pred_fallthru
      _
    // Predicated region
    $region58: #{tpu_custom_call.1} parent=1 // pred_check
      _
    $region59: #{tpu_custom_call.1} parent=1 // pred_check_branch
      %92 = sbr.rel (0) target = $region61
    $region60: #{tpu_custom_call.1} parent=1 // pred_region
      %93 = dma.done [#allocation6], 2048
    $region61: #{tpu_custom_call.1} parent=1 // pred_fallthru
      _
    // Predicated region
    $region62: #{tpu_custom_call.1} parent=1 // pred_check
      _
    $region63: #{tpu_custom_call.1} parent=1 // pred_check_branch
      %95 = sbr.rel (0) target = $region65
    $region64: #{tpu_custom_call.1} parent=1 // pred_region
      %96 = dma.done [#allocation9], 1024
    $region65: #{tpu_custom_call.1} parent=1 // pred_fallthru
      _
    %v98 = vld [vmem:[%s0] sm:$0xff]
    %v99 = vld [vmem:[%s0 + $0x8] sm:$0xff]
    %v100 = vld [vmem:[%s0 + $0x10] sm:$0xff]
    %v101 = vld [vmem:[%s0 + $0x18] sm:$0xff]
    %v102 = vld [vmem:[%s0 + $0x20] sm:$0xff]
    %v103 = vld [vmem:[%s0 + $0x28] sm:$0xff]
    %v104 = vld [vmem:[%s0 + $0x30] sm:$0xff]
    %v105 = vld [vmem:[%s0 + $0x38] sm:$0xff]
    %v106 = vld [vmem:[%s0 + $0x40] sm:$0xff]
    %v107 = vld [vmem:[%s0 + $0x48] sm:$0xff]
    %v108 = vld [vmem:[%s0 + $0x50] sm:$0xff]
    %v109 = vld [vmem:[%s0 + $0x58] sm:$0xff]
    %v110 = vld [vmem:[%s0 + $0x60] sm:$0xff]
    %v111 = vld [vmem:[%s0 + $0x68] sm:$0xff]
    %v112 = vld [vmem:[%s0 + $0x70] sm:$0xff]
    %v113 = vld [vmem:[%s0 + $0x78] sm:$0xff]
    %v114 = vld [vmem:[%s2] sm:$0xf]
    %v115 = vld [vmem:[%s1] sm:$0xff]
    %v116 = vld [vmem:[%s1 + $0x8] sm:$0xff]
    %v117 = vld [vmem:[%s1 + $0x10] sm:$0xff]
    %v118 = vld [vmem:[%s1 + $0x18] sm:$0xff]
    %v119 = vld [vmem:[%s1 + $0x20] sm:$0xff]
    %v120 = vld [vmem:[%s1 + $0x28] sm:$0xff]
    %v121 = vld [vmem:[%s1 + $0x30] sm:$0xff]
    %v122 = vld [vmem:[%s1 + $0x38] sm:$0xff]
    %v123 = vld [vmem:[%s1 + $0x40] sm:$0xff]
    %v124 = vld [vmem:[%s1 + $0x48] sm:$0xff]
    %v125 = vld [vmem:[%s1 + $0x50] sm:$0xff]
    %v126 = vld [vmem:[%s1 + $0x58] sm:$0xff]
    %v127 = vld [vmem:[%s1 + $0x60] sm:$0xff]
    %v128 = vld [vmem:[%s1 + $0x68] sm:$0xff]
    %v129 = vld [vmem:[%s1 + $0x70] sm:$0xff]
    %v130 = vld [vmem:[%s1 + $0x78] sm:$0xff]
    %vm131 = vcmask 31744
    %v133 = vsel %vm131, %v98, 0
    %v136 = vsel %vm131, %v99, 0
    %v139 = vsel %vm131, %v100, 0
    %v142 = vsel %vm131, %v101, 0
    %v145 = vsel %vm131, %v102, 0
    %v148 = vsel %vm131, %v103, 0
    %v151 = vsel %vm131, %v104, 0
    %v154 = vsel %vm131, %v105, 0
    %v157 = vsel %vm131, %v106, 0
    %v160 = vsel %vm131, %v107, 0
    %v163 = vsel %vm131, %v108, 0
    %v166 = vsel %vm131, %v109, 0
    %v169 = vsel %vm131, %v110, 0
    %v172 = vsel %vm131, %v111, 0
    %v175 = vsel %vm131, %v112, 0
    %v178 = vsel %vm131, %v113, 0
    %vm180 = vcmask 1043456
    %v182 = vsel %vm180, %v114, 0
    %184 = vmatprep.subr.mxu0 0.0
    %185 = vmatpush1.msra.mxu0 0.0
    %186 = vmatprep.subr.mxu0 0.0
    %187 = vmatpush1.msra.mxu0 0.0
    %188 = vmatprep.subr.mxu0 0.0
    %189 = vmatpush1.msra.mxu0 0.0
    %190 = vmatprep.subr.mxu0 0.0
    %191 = vmatpush1.msra.mxu0 0.0
    %192 = vmatprep.subr.mxu0 0.0
    %193 = vmatpush1.msra.mxu0 0.0
    %194 = vmatprep.subr.mxu0 0.0
    %195 = vmatpush1.msra.mxu0 0.0
    %196 = vmatprep.subr.mxu0 0.0
    %197 = vmatpush1.msra.mxu0 0.0
    %198 = vmatprep.subr.mxu0 0.0
    %199 = vmatpush1.msra.mxu0 0.0
    %200 = vmatprep.subr.mxu0 0.0
    %201 = vmatpush1.msra.mxu0 0.0
    %202 = vmatprep.subr.mxu0 0.0
    %203 = vmatpush1.msra.mxu0 0.0
    %204 = vmatprep.subr.mxu0 0.0
    %205 = vmatpush1.msra.mxu0 0.0
    %206 = vmatprep.subr.mxu0 0.0
    %207 = vmatpush1.msra.mxu0 0.0
    %208 = vmatprep.subr.mxu0 0.0
    %209 = vmatpush1.msra.mxu0 0.0
    %210 = vmatprep.subr.mxu0 0.0
    %211 = vmatpush1.msra.mxu0 0.0
    %212 = vmatprep.subr.mxu0 0.0
    %213 = vmatpush1.msra.mxu0 0.0
    %214 = vmatprep.subr.mxu0 0.0
    %215 = vmatpush1.msra.mxu0 %v182
    %216 = vmatprep.subr.mxu0 0.0
    %217 = vmatpush2.msra.mxu0 0.0
    %218 = vmatprep.subr.mxu0 0.0
    %219 = vmatpush2.msra.mxu0 0.0
    %220 = vmatprep.subr.mxu0 0.0
    %221 = vmatpush2.msra.mxu0 0.0
    %222 = vmatprep.subr.mxu0 0.0
    %223 = vmatpush2.msra.mxu0 0.0
    %224 = vmatprep.subr.mxu0 0.0
    %225 = vmatpush2.msra.mxu0 0.0
    %226 = vmatprep.subr.mxu0 0.0
    %227 = vmatpush2.msra.mxu0 0.0
    %228 = vmatprep.subr.mxu0 0.0
    %229 = vmatpush2.msra.mxu0 0.0
    %230 = vmatprep.subr.mxu0 0.0
    %231 = vmatpush2.msra.mxu0 0.0
    %232 = vmatprep.subr.mxu0 0.0
    %233 = vmatpush2.msra.mxu0 0.0
    %234 = vmatprep.subr.mxu0 0.0
    %235 = vmatpush2.msra.mxu0 0.0
    %236 = vmatprep.subr.mxu0 0.0
    %237 = vmatpush2.msra.mxu0 0.0
    %238 = vmatprep.subr.mxu0 0.0
    %239 = vmatpush2.msra.mxu0 0.0
    %240 = vmatprep.subr.mxu0 0.0
    %241 = vmatpush2.msra.mxu0 0.0
    %242 = vmatprep.subr.mxu0 0.0
    %243 = vmatpush2.msra.mxu0 0.0
    %244 = vmatprep.subr.mxu0 0.0
    %245 = vmatpush2.msra.mxu0 0.0
    %246 = vmatprep.subr.mxu0 0.0
    %247 = vmatpush2.msra.mxu0 0.0
    %248 = vmatprep.mubr.f32.mxu0 0.0
    %249 = vmatmul.mubr.f32.gmra.mxu0 %v133
    %v250 = vpop.f32.mrf.mxu0
    %v251 = vadd.f32 %v115, %v250
    %v252 = vpop.f32.mrf.mxu0
    %253 = vmatprep.mubr.f32.mxu0 0.0
    %254 = vmatmul.mubr.f32.gmra.mxu0 %v136
    %v255 = vpop.f32.mrf.mxu0
    %v256 = vadd.f32 %v116, %v255
    %v257 = vpop.f32.mrf.mxu0
    %258 = vmatprep.mubr.f32.mxu0 0.0
    %259 = vmatmul.mubr.f32.gmra.mxu0 %v139
    %v260 = vpop.f32.mrf.mxu0
    %v261 = vadd.f32 %v117, %v260
    %v262 = vpop.f32.mrf.mxu0
    %263 = vmatprep.mubr.f32.mxu0 0.0
    %264 = vmatmul.mubr.f32.gmra.mxu0 %v142
    %v265 = vpop.f32.mrf.mxu0
    %v266 = vadd.f32 %v118, %v265
    %v267 = vpop.f32.mrf.mxu0
    %268 = vmatprep.mubr.f32.mxu0 0.0
    %269 = vmatmul.mubr.f32.gmra.mxu0 %v145
    %v270 = vpop.f32.mrf.mxu0
    %v271 = vadd.f32 %v119, %v270
    %v272 = vpop.f32.mrf.mxu0
    %273 = vmatprep.mubr.f32.mxu0 0.0
    %274 = vmatmul.mubr.f32.gmra.mxu0 %v148
    %v275 = vpop.f32.mrf.mxu0
    %v276 = vadd.f32 %v120, %v275
    %v277 = vpop.f32.mrf.mxu0
    %278 = vmatprep.mubr.f32.mxu0 0.0
    %279 = vmatmul.mubr.f32.gmra.mxu0 %v151
    %v280 = vpop.f32.mrf.mxu0
    %v281 = vadd.f32 %v121, %v280
    %v282 = vpop.f32.mrf.mxu0
    %283 = vmatprep.mubr.f32.mxu0 0.0
    %284 = vmatmul.mubr.f32.gmra.mxu0 %v154
    %v285 = vpop.f32.mrf.mxu0
    %v286 = vadd.f32 %v122, %v285
    %v287 = vpop.f32.mrf.mxu0
    %288 = vmatprep.mubr.f32.mxu0 0.0
    %289 = vmatmul.mubr.f32.gmra.mxu0 %v157
    %v290 = vpop.f32.mrf.mxu0
    %v291 = vadd.f32 %v123, %v290
    %v292 = vpop.f32.mrf.mxu0
    %293 = vmatprep.mubr.f32.mxu0 0.0
    %294 = vmatmul.mubr.f32.gmra.mxu0 %v160
    %v295 = vpop.f32.mrf.mxu0
    %v296 = vadd.f32 %v124, %v295
    %v297 = vpop.f32.mrf.mxu0
    %298 = vmatprep.mubr.f32.mxu0 0.0
    %299 = vmatmul.mubr.f32.gmra.mxu0 %v163
    %v300 = vpop.f32.mrf.mxu0
    %v301 = vadd.f32 %v125, %v300
    %v302 = vpop.f32.mrf.mxu0
    %303 = vmatprep.mubr.f32.mxu0 0.0
    %304 = vmatmul.mubr.f32.gmra.mxu0 %v166
    %v305 = vpop.f32.mrf.mxu0
    %v306 = vadd.f32 %v126, %v305
    %v307 = vpop.f32.mrf.mxu0
    %308 = vmatprep.mubr.f32.mxu0 0.0
    %309 = vmatmul.mubr.f32.gmra.mxu0 %v169
    %v310 = vpop.f32.mrf.mxu0
    %v311 = vadd.f32 %v127, %v310
    %v312 = vpop.f32.mrf.mxu0
    %313 = vmatprep.mubr.f32.mxu0 0.0
    %314 = vmatmul.mubr.f32.gmra.mxu0 %v172
    %v315 = vpop.f32.mrf.mxu0
    %v316 = vadd.f32 %v128, %v315
    %v317 = vpop.f32.mrf.mxu0
    %318 = vmatprep.mubr.f32.mxu0 0.0
    %319 = vmatmul.mubr.f32.gmra.mxu0 %v175
    %v320 = vpop.f32.mrf.mxu0
    %v321 = vadd.f32 %v129, %v320
    %v322 = vpop.f32.mrf.mxu0
    %323 = vmatprep.mubr.f32.mxu0 0.0
    %324 = vmatmul.mubr.f32.gmra.mxu0 %v178
    %v325 = vpop.f32.mrf.mxu0
    %v326 = vadd.f32 %v130, %v325
    %v327 = vpop.f32.mrf.mxu0
    %328 = vdwg.mxu0
    %v329 = vld [vmem:[%s3] sm:$0x1]
    %v331 = vlaneseq
    %v332 = vshrl.u32 %v331, 7
    %v333 = vsub.s32 0, %v332
    %v334 = vrot.slane %v329, %v333
    %v336 = vadd.f32 %v251, %v334
    %v337 = vadd.f32 %v256, %v334
    %v338 = vadd.f32 %v261, %v334
    %v339 = vadd.f32 %v266, %v334
    %v340 = vadd.f32 %v271, %v334
    %v341 = vadd.f32 %v276, %v334
    %v342 = vadd.f32 %v281, %v334
    %v343 = vadd.f32 %v286, %v334
    %v344 = vadd.f32 %v291, %v334
    %v345 = vadd.f32 %v296, %v334
    %v346 = vadd.f32 %v301, %v334
    %v347 = vadd.f32 %v306, %v334
    %v348 = vadd.f32 %v311, %v334
    %v349 = vadd.f32 %v316, %v334
    %v350 = vadd.f32 %v321, %v334
    %v351 = vadd.f32 %v326, %v334
    %v352 = vmax.f32 %v336, 0.0
    %v353 = vmax.f32 %v337, 0.0
    %v354 = vmax.f32 %v338, 0.0
    %v355 = vmax.f32 %v339, 0.0
    %v356 = vmax.f32 %v340, 0.0
    %v357 = vmax.f32 %v341, 0.0
    %v358 = vmax.f32 %v342, 0.0
    %v359 = vmax.f32 %v343, 0.0
    %v360 = vmax.f32 %v344, 0.0
    %v361 = vmax.f32 %v345, 0.0
    %v362 = vmax.f32 %v346, 0.0
    %v363 = vmax.f32 %v347, 0.0
    %v364 = vmax.f32 %v348, 0.0
    %v365 = vmax.f32 %v349, 0.0
    %v366 = vmax.f32 %v350, 0.0
    %v367 = vmax.f32 %v351, 0.0
    %v368 = vmin.f32 %v352, 6.0
    %v369 = vmin.f32 %v353, 6.0
    %v370 = vmin.f32 %v354, 6.0
    %v371 = vmin.f32 %v355, 6.0
    %v372 = vmin.f32 %v356, 6.0
    %v373 = vmin.f32 %v357, 6.0
    %v374 = vmin.f32 %v358, 6.0
    %v375 = vmin.f32 %v359, 6.0
    %v376 = vmin.f32 %v360, 6.0
    %v377 = vmin.f32 %v361, 6.0
    %v378 = vmin.f32 %v362, 6.0
    %v379 = vmin.f32 %v363, 6.0
    %v380 = vmin.f32 %v364, 6.0
    %v381 = vmin.f32 %v365, 6.0
    %v382 = vmin.f32 %v366, 6.0
    %v383 = vmin.f32 %v367, 6.0
    %v384 = vpack.c.bf16 %v369, %v368
    %v385 = vpack.c.bf16 %v371, %v370
    %v386 = vpack.c.bf16 %v373, %v372
    %v387 = vpack.c.bf16 %v375, %v374
    %v388 = vpack.c.bf16 %v377, %v376
    %v389 = vpack.c.bf16 %v379, %v378
    %v390 = vpack.c.bf16 %v381, %v380
    %v391 = vpack.c.bf16 %v383, %v382
    %v392 = vld [vmem:[#allocation2] sm:$0xff]
    %v393 = vld [vmem:[#allocation2 + $0x8] sm:$0xff]
    %v394 = vld [vmem:[#allocation2 + $0x10] sm:$0xff]
    %v395 = vld [vmem:[#allocation2 + $0x18] sm:$0xff]
    %v396 = vld [vmem:[#allocation2 + $0x20] sm:$0xff]
    %v397 = vld [vmem:[#allocation2 + $0x28] sm:$0xff]
    %v398 = vld [vmem:[#allocation2 + $0x30] sm:$0xff]
    %v399 = vld [vmem:[#allocation2 + $0x38] sm:$0xff]
    %v400 = vld [vmem:[#allocation2 + $0x40] sm:$0xff]
    %v401 = vld [vmem:[#allocation2 + $0x48] sm:$0xff]
    %v402 = vld [vmem:[#allocation2 + $0x50] sm:$0xff]
    %v403 = vld [vmem:[#allocation2 + $0x58] sm:$0xff]
    %v404 = vld [vmem:[#allocation2 + $0x60] sm:$0xff]
    %v405 = vld [vmem:[#allocation2 + $0x68] sm:$0xff]
    %v406 = vld [vmem:[#allocation2 + $0x70] sm:$0xff]
    %v407 = vld [vmem:[#allocation2 + $0x78] sm:$0xff]
    %v408 = vld [vmem:[%s5] sm:$0x3]
    %v410 = vlaneseq
    %v411 = vshrl.u32 %v410, 7
    %v412 = vsub.s32 0, %v411
    %v413 = vrot.slane %v408, %v412
    %v414 = vlaneseq
    %v415 = vshrl.u32 %v414, 7
    %v416 = vsub.s32 1, %v415
    %v417 = vrot.slane %v408, %v416
    %v436 = vunpack.c.l.b16 %v392
    %v437 = vunpack.c.h.b16 %v392
    %v438 = vunpack.c.l.b16 %v393
    %v439 = vunpack.c.h.b16 %v393
    %v440 = vunpack.c.l.b16 %v394
    %v441 = vunpack.c.h.b16 %v394
    %v442 = vunpack.c.l.b16 %v395
    %v443 = vunpack.c.h.b16 %v395
    %v444 = vunpack.c.l.b16 %v396
    %v445 = vunpack.c.h.b16 %v396
    %v446 = vunpack.c.l.b16 %v397
    %v447 = vunpack.c.h.b16 %v397
    %v448 = vunpack.c.l.b16 %v398
    %v449 = vunpack.c.h.b16 %v398
    %v450 = vunpack.c.l.b16 %v399
    %v451 = vunpack.c.h.b16 %v399
    %v452 = vunpack.c.l.b16 %v400
    %v453 = vunpack.c.h.b16 %v400
    %v454 = vunpack.c.l.b16 %v401
    %v455 = vunpack.c.h.b16 %v401
    %v456 = vunpack.c.l.b16 %v402
    %v457 = vunpack.c.h.b16 %v402
    %v458 = vunpack.c.l.b16 %v403
    %v459 = vunpack.c.h.b16 %v403
    %v460 = vunpack.c.l.b16 %v404
    %v461 = vunpack.c.h.b16 %v404
    %v462 = vunpack.c.l.b16 %v405
    %v463 = vunpack.c.h.b16 %v405
    %v464 = vunpack.c.l.b16 %v406
    %v465 = vunpack.c.h.b16 %v406
    %v466 = vunpack.c.l.b16 %v407
    %v467 = vunpack.c.h.b16 %v407
    %v468 = vpack.c.b16 %v438, %v436
    %v469 = vpack.c.b16 %v439, %v437
    %v470 = vpack.c.b16 %v442, %v440
    %v471 = vpack.c.b16 %v443, %v441
    %v472 = vpack.c.b16 %v446, %v444
    %v473 = vpack.c.b16 %v447, %v445
    %v474 = vpack.c.b16 %v450, %v448
    %v475 = vpack.c.b16 %v451, %v449
    %v476 = vpack.c.b16 %v454, %v452
    %v477 = vpack.c.b16 %v455, %v453
    %v478 = vpack.c.b16 %v458, %v456
    %v479 = vpack.c.b16 %v459, %v457
    %v480 = vpack.c.b16 %v462, %v460
    %v481 = vpack.c.b16 %v463, %v461
    %v482 = vpack.c.b16 %v466, %v464
    %v483 = vpack.c.b16 %v467, %v465
    %500 = vmatprep.subr.bf16.mxu0 %v483
    %501 = vmatpush1.bf16.msra.mxu0 %v482
    %502 = vmatprep.subr.bf16.mxu0 %v481
    %503 = vmatpush1.bf16.msra.mxu0 %v480
    %504 = vmatprep.subr.bf16.mxu0 %v479
    %505 = vmatpush1.bf16.msra.mxu0 %v478
    %506 = vmatprep.subr.bf16.mxu0 %v477
    %507 = vmatpush1.bf16.msra.mxu0 %v476
    %508 = vmatprep.subr.bf16.mxu0 %v475
    %509 = vmatpush1.bf16.msra.mxu0 %v474
    %510 = vmatprep.subr.bf16.mxu0 %v473
    %511 = vmatpush1.bf16.msra.mxu0 %v472
    %512 = vmatprep.subr.bf16.mxu0 %v471
    %513 = vmatpush1.bf16.msra.mxu0 %v470
    %514 = vmatprep.subr.bf16.mxu0 %v469
    %515 = vmatpush1.bf16.msra.mxu0 %v468
    %516 = vmatprep.subr.bf16.mxu0 0
    %517 = vmatpush2.bf16.msra.mxu0 0
    %518 = vmatprep.subr.bf16.mxu0 0
    %519 = vmatpush2.bf16.msra.mxu0 0
    %520 = vmatprep.subr.bf16.mxu0 0
    %521 = vmatpush2.bf16.msra.mxu0 0
    %522 = vmatprep.subr.bf16.mxu0 0
    %523 = vmatpush2.bf16.msra.mxu0 0
    %524 = vmatprep.subr.bf16.mxu0 0
    %525 = vmatpush2.bf16.msra.mxu0 0
    %526 = vmatprep.subr.bf16.mxu0 0
    %527 = vmatpush2.bf16.msra.mxu0 0
    %528 = vmatprep.subr.bf16.mxu0 0
    %529 = vmatpush2.bf16.msra.mxu0 0
    %530 = vmatprep.subr.bf16.mxu0 0
    %531 = vmatpush2.bf16.msra.mxu0 0
    %532 = vmatprep.mubr.bf16.mxu0 0
    %533 = vmatmul.mubr.bf16.gmra.mxu0 %v384
    %v534 = vpop.f32.mrf.mxu0
    %v535 = vadd.f32 %v413, %v534
    %v536 = vpop.f32.mrf.mxu0
    %v537 = vadd.f32 %v417, %v536
    %v538 = vpop.f32.mrf.mxu0
    %v539 = vadd.f32 %v413, %v538
    %v540 = vpop.f32.mrf.mxu0
    %v541 = vadd.f32 %v417, %v540
    %542 = vmatprep.mubr.bf16.mxu0 0
    %543 = vmatmul.mubr.bf16.gmra.mxu0 %v385
    %v544 = vpop.f32.mrf.mxu0
    %v545 = vadd.f32 %v413, %v544
    %v546 = vpop.f32.mrf.mxu0
    %v547 = vadd.f32 %v417, %v546
    %v548 = vpop.f32.mrf.mxu0
    %v549 = vadd.f32 %v413, %v548
    %v550 = vpop.f32.mrf.mxu0
    %v551 = vadd.f32 %v417, %v550
    %552 = vmatprep.mubr.bf16.mxu0 0
    %553 = vmatmul.mubr.bf16.gmra.mxu0 %v386
    %v554 = vpop.f32.mrf.mxu0
    %v555 = vadd.f32 %v413, %v554
    %v556 = vpop.f32.mrf.mxu0
    %v557 = vadd.f32 %v417, %v556
    %v558 = vpop.f32.mrf.mxu0
    %v559 = vadd.f32 %v413, %v558
    %v560 = vpop.f32.mrf.mxu0
    %v561 = vadd.f32 %v417, %v560
    %562 = vmatprep.mubr.bf16.mxu0 0
    %563 = vmatmul.mubr.bf16.gmra.mxu0 %v387
    %v564 = vpop.f32.mrf.mxu0
    %v565 = vadd.f32 %v413, %v564
    %v566 = vpop.f32.mrf.mxu0
    %v567 = vadd.f32 %v417, %v566
    %v568 = vpop.f32.mrf.mxu0
    %v569 = vadd.f32 %v413, %v568
    %v570 = vpop.f32.mrf.mxu0
    %v571 = vadd.f32 %v417, %v570
    %572 = vmatprep.mubr.bf16.mxu0 0
    %573 = vmatmul.mubr.bf16.gmra.mxu0 %v388
    %v574 = vpop.f32.mrf.mxu0
    %v575 = vadd.f32 %v413, %v574
    %v576 = vpop.f32.mrf.mxu0
    %v577 = vadd.f32 %v417, %v576
    %v578 = vpop.f32.mrf.mxu0
    %v579 = vadd.f32 %v413, %v578
    %v580 = vpop.f32.mrf.mxu0
    %v581 = vadd.f32 %v417, %v580
    %582 = vmatprep.mubr.bf16.mxu0 0
    %583 = vmatmul.mubr.bf16.gmra.mxu0 %v389
    %v584 = vpop.f32.mrf.mxu0
    %v585 = vadd.f32 %v413, %v584
    %v586 = vpop.f32.mrf.mxu0
    %v587 = vadd.f32 %v417, %v586
    %v588 = vpop.f32.mrf.mxu0
    %v589 = vadd.f32 %v413, %v588
    %v590 = vpop.f32.mrf.mxu0
    %v591 = vadd.f32 %v417, %v590
    %592 = vmatprep.mubr.bf16.mxu0 0
    %593 = vmatmul.mubr.bf16.gmra.mxu0 %v390
    %v594 = vpop.f32.mrf.mxu0
    %v595 = vadd.f32 %v413, %v594
    %v596 = vpop.f32.mrf.mxu0
    %v597 = vadd.f32 %v417, %v596
    %v598 = vpop.f32.mrf.mxu0
    %v599 = vadd.f32 %v413, %v598
    %v600 = vpop.f32.mrf.mxu0
    %v601 = vadd.f32 %v417, %v600
    %602 = vmatprep.mubr.bf16.mxu0 0
    %603 = vmatmul.mubr.bf16.gmra.mxu0 %v391
    %v604 = vpop.f32.mrf.mxu0
    %v605 = vadd.f32 %v413, %v604
    %v606 = vpop.f32.mrf.mxu0
    %v607 = vadd.f32 %v417, %v606
    %v608 = vpop.f32.mrf.mxu0
    %v609 = vadd.f32 %v413, %v608
    %v610 = vpop.f32.mrf.mxu0
    %v611 = vadd.f32 %v417, %v610
    %612 = vdwg.mxu0
    %v613 = vmax.f32 %v535, 0.0
    %v614 = vmax.f32 %v537, 0.0
    %v615 = vmax.f32 %v539, 0.0
    %v616 = vmax.f32 %v541, 0.0
    %v617 = vmax.f32 %v545, 0.0
    %v618 = vmax.f32 %v547, 0.0
    %v619 = vmax.f32 %v549, 0.0
    %v620 = vmax.f32 %v551, 0.0
    %v621 = vmax.f32 %v555, 0.0
    %v622 = vmax.f32 %v557, 0.0
    %v623 = vmax.f32 %v559, 0.0
    %v624 = vmax.f32 %v561, 0.0
    %v625 = vmax.f32 %v565, 0.0
    %v626 = vmax.f32 %v567, 0.0
    %v627 = vmax.f32 %v569, 0.0
    %v628 = vmax.f32 %v571, 0.0
    %v629 = vmax.f32 %v575, 0.0
    %v630 = vmax.f32 %v577, 0.0
    %v631 = vmax.f32 %v579, 0.0
    %v632 = vmax.f32 %v581, 0.0
    %v633 = vmax.f32 %v585, 0.0
    %v634 = vmax.f32 %v587, 0.0
    %v635 = vmax.f32 %v589, 0.0
    %v636 = vmax.f32 %v591, 0.0
    %v637 = vmax.f32 %v595, 0.0
    %v638 = vmax.f32 %v597, 0.0
    %v639 = vmax.f32 %v599, 0.0
    %v640 = vmax.f32 %v601, 0.0
    %v641 = vmax.f32 %v605, 0.0
    %v642 = vmax.f32 %v607, 0.0
    %v643 = vmax.f32 %v609, 0.0
    %v644 = vmax.f32 %v611, 0.0
    %v645 = vpack.c.bf16 %v615, %v613
    %v646 = vpack.c.bf16 %v616, %v614
    %v647 = vpack.c.bf16 %v619, %v617
    %v648 = vpack.c.bf16 %v620, %v618
    %v649 = vpack.c.bf16 %v623, %v621
    %v650 = vpack.c.bf16 %v624, %v622
    %v651 = vpack.c.bf16 %v627, %v625
    %v652 = vpack.c.bf16 %v628, %v626
    %v653 = vpack.c.bf16 %v631, %v629
    %v654 = vpack.c.bf16 %v632, %v630
    %v655 = vpack.c.bf16 %v635, %v633
    %v656 = vpack.c.bf16 %v636, %v634
    %v657 = vpack.c.bf16 %v639, %v637
    %v658 = vpack.c.bf16 %v640, %v638
    %v659 = vpack.c.bf16 %v643, %v641
    %v660 = vpack.c.bf16 %v644, %v642
    %v661 = vld [vmem:[#allocation5] sm:$0xff]
    %v662 = vld [vmem:[#allocation5 + $0x8] sm:$0xff]
    %v663 = vld [vmem:[#allocation5 + $0x10] sm:$0xff]
    %v664 = vld [vmem:[#allocation5 + $0x18] sm:$0xff]
    %v665 = vld [vmem:[#allocation5 + $0x20] sm:$0xff]
    %v666 = vld [vmem:[#allocation5 + $0x28] sm:$0xff]
    %v667 = vld [vmem:[#allocation5 + $0x30] sm:$0xff]
    %v668 = vld [vmem:[#allocation5 + $0x38] sm:$0xff]
    %v669 = vld [vmem:[#allocation5 + $0x40] sm:$0xff]
    %v670 = vld [vmem:[#allocation5 + $0x48] sm:$0xff]
    %v671 = vld [vmem:[#allocation5 + $0x50] sm:$0xff]
    %v672 = vld [vmem:[#allocation5 + $0x58] sm:$0xff]
    %v673 = vld [vmem:[#allocation5 + $0x60] sm:$0xff]
    %v674 = vld [vmem:[#allocation5 + $0x68] sm:$0xff]
    %v675 = vld [vmem:[#allocation5 + $0x70] sm:$0xff]
    %v676 = vld [vmem:[#allocation5 + $0x78] sm:$0xff]
    %v677 = vld [vmem:[#allocation5 + $0x80] sm:$0xff]
    %v678 = vld [vmem:[#allocation5 + $0x88] sm:$0xff]
    %v679 = vld [vmem:[#allocation5 + $0x90] sm:$0xff]
    %v680 = vld [vmem:[#allocation5 + $0x98] sm:$0xff]
    %v681 = vld [vmem:[#allocation5 + $0xa0] sm:$0xff]
    %v682 = vld [vmem:[#allocation5 + $0xa8] sm:$0xff]
    %v683 = vld [vmem:[#allocation5 + $0xb0] sm:$0xff]
    %v684 = vld [vmem:[#allocation5 + $0xb8] sm:$0xff]
    %v685 = vld [vmem:[#allocation5 + $0xc0] sm:$0xff]
    %v686 = vld [vmem:[#allocation5 + $0xc8] sm:$0xff]
    %v687 = vld [vmem:[#allocation5 + $0xd0] sm:$0xff]
    %v688 = vld [vmem:[#allocation5 + $0xd8] sm:$0xff]
    %v689 = vld [vmem:[#allocation5 + $0xe0] sm:$0xff]
    %v690 = vld [vmem:[#allocation5 + $0xe8] sm:$0xff]
    %v691 = vld [vmem:[#allocation5 + $0xf0] sm:$0xff]
    %v692 = vld [vmem:[#allocation5 + $0xf8] sm:$0xff]
    %v693 = vld [vmem:[%s7] sm:$0x3]
    %v695 = vlaneseq
    %v696 = vshrl.u32 %v695, 7
    %v697 = vsub.s32 0, %v696
    %v698 = vrot.slane %v693, %v697
    %v699 = vlaneseq
    %v700 = vshrl.u32 %v699, 7
    %v701 = vsub.s32 1, %v700
    %v702 = vrot.slane %v693, %v701
    %v737 = vunpack.c.l.b16 %v661
    %v738 = vunpack.c.h.b16 %v661
    %v739 = vunpack.c.l.b16 %v662
    %v740 = vunpack.c.h.b16 %v662
    %v741 = vunpack.c.l.b16 %v663
    %v742 = vunpack.c.h.b16 %v663
    %v743 = vunpack.c.l.b16 %v664
    %v744 = vunpack.c.h.b16 %v664
    %v745 = vunpack.c.l.b16 %v665
    %v746 = vunpack.c.h.b16 %v665
    %v747 = vunpack.c.l.b16 %v666
    %v748 = vunpack.c.h.b16 %v666
    %v749 = vunpack.c.l.b16 %v667
    %v750 = vunpack.c.h.b16 %v667
    %v751 = vunpack.c.l.b16 %v668
    %v752 = vunpack.c.h.b16 %v668
    %v753 = vunpack.c.l.b16 %v669
    %v754 = vunpack.c.h.b16 %v669
    %v755 = vunpack.c.l.b16 %v670
    %v756 = vunpack.c.h.b16 %v670
    %v757 = vunpack.c.l.b16 %v671
    %v758 = vunpack.c.h.b16 %v671
    %v759 = vunpack.c.l.b16 %v672
    %v760 = vunpack.c.h.b16 %v672
    %v761 = vunpack.c.l.b16 %v673
    %v762 = vunpack.c.h.b16 %v673
    %v763 = vunpack.c.l.b16 %v674
    %v764 = vunpack.c.h.b16 %v674
    %v765 = vunpack.c.l.b16 %v675
    %v766 = vunpack.c.h.b16 %v675
    %v767 = vunpack.c.l.b16 %v676
    %v768 = vunpack.c.h.b16 %v676
    %v769 = vunpack.c.l.b16 %v677
    %v770 = vunpack.c.h.b16 %v677
    %v771 = vunpack.c.l.b16 %v678
    %v772 = vunpack.c.h.b16 %v678
    %v773 = vunpack.c.l.b16 %v679
    %v774 = vunpack.c.h.b16 %v679
    %v775 = vunpack.c.l.b16 %v680
    %v776 = vunpack.c.h.b16 %v680
    %v777 = vunpack.c.l.b16 %v681
    %v778 = vunpack.c.h.b16 %v681
    %v779 = vunpack.c.l.b16 %v682
    %v780 = vunpack.c.h.b16 %v682
    %v781 = vunpack.c.l.b16 %v683
    %v782 = vunpack.c.h.b16 %v683
    %v783 = vunpack.c.l.b16 %v684
    %v784 = vunpack.c.h.b16 %v684
    %v785 = vunpack.c.l.b16 %v685
    %v786 = vunpack.c.h.b16 %v685
    %v787 = vunpack.c.l.b16 %v686
    %v788 = vunpack.c.h.b16 %v686
    %v789 = vunpack.c.l.b16 %v687
    %v790 = vunpack.c.h.b16 %v687
    %v791 = vunpack.c.l.b16 %v688
    %v792 = vunpack.c.h.b16 %v688
    %v793 = vunpack.c.l.b16 %v689
    %v794 = vunpack.c.h.b16 %v689
    %v795 = vunpack.c.l.b16 %v690
    %v796 = vunpack.c.h.b16 %v690
    %v797 = vunpack.c.l.b16 %v691
    %v798 = vunpack.c.h.b16 %v691
    %v799 = vunpack.c.l.b16 %v692
    %v800 = vunpack.c.h.b16 %v692
    %v801 = vpack.c.b16 %v739, %v737
    %v802 = vpack.c.b16 %v740, %v738
    %v803 = vpack.c.b16 %v743, %v741
    %v804 = vpack.c.b16 %v744, %v742
    %v805 = vpack.c.b16 %v747, %v745
    %v806 = vpack.c.b16 %v748, %v746
    %v807 = vpack.c.b16 %v751, %v749
    %v808 = vpack.c.b16 %v752, %v750
    %v809 = vpack.c.b16 %v755, %v753
    %v810 = vpack.c.b16 %v756, %v754
    %v811 = vpack.c.b16 %v759, %v757
    %v812 = vpack.c.b16 %v760, %v758
    %v813 = vpack.c.b16 %v763, %v761
    %v814 = vpack.c.b16 %v764, %v762
    %v815 = vpack.c.b16 %v767, %v765
    %v816 = vpack.c.b16 %v768, %v766
    %v817 = vpack.c.b16 %v771, %v769
    %v818 = vpack.c.b16 %v772, %v770
    %v819 = vpack.c.b16 %v775, %v773
    %v820 = vpack.c.b16 %v776, %v774
    %v821 = vpack.c.b16 %v779, %v777
    %v822 = vpack.c.b16 %v780, %v778
    %v823 = vpack.c.b16 %v783, %v781
    %v824 = vpack.c.b16 %v784, %v782
    %v825 = vpack.c.b16 %v787, %v785
    %v826 = vpack.c.b16 %v788, %v786
    %v827 = vpack.c.b16 %v791, %v789
    %v828 = vpack.c.b16 %v792, %v790
    %v829 = vpack.c.b16 %v795, %v793
    %v830 = vpack.c.b16 %v796, %v794
    %v831 = vpack.c.b16 %v799, %v797
    %v832 = vpack.c.b16 %v800, %v798
    %865 = vmatprep.subr.bf16.mxu0 %v816
    %866 = vmatpush1.bf16.msra.mxu0 %v815
    %867 = vmatprep.subr.bf16.mxu0 %v814
    %868 = vmatpush1.bf16.msra.mxu0 %v813
    %869 = vmatprep.subr.bf16.mxu0 %v812
    %870 = vmatpush1.bf16.msra.mxu0 %v811
    %871 = vmatprep.subr.bf16.mxu0 %v810
    %872 = vmatpush1.bf16.msra.mxu0 %v809
    %873 = vmatprep.subr.bf16.mxu0 %v808
    %874 = vmatpush1.bf16.msra.mxu0 %v807
    %875 = vmatprep.subr.bf16.mxu0 %v806
    %876 = vmatpush1.bf16.msra.mxu0 %v805
    %877 = vmatprep.subr.bf16.mxu0 %v804
    %878 = vmatpush1.bf16.msra.mxu0 %v803
    %879 = vmatprep.subr.bf16.mxu0 %v802
    %880 = vmatpush1.bf16.msra.mxu0 %v801
    %881 = vmatprep.subr.bf16.mxu0 %v832
    %882 = vmatpush2.bf16.msra.mxu0 %v831
    %883 = vmatprep.subr.bf16.mxu0 %v830
    %884 = vmatpush2.bf16.msra.mxu0 %v829
    %885 = vmatprep.subr.bf16.mxu0 %v828
    %886 = vmatpush2.bf16.msra.mxu0 %v827
    %887 = vmatprep.subr.bf16.mxu0 %v826
    %888 = vmatpush2.bf16.msra.mxu0 %v825
    %889 = vmatprep.subr.bf16.mxu0 %v824
    %890 = vmatpush2.bf16.msra.mxu0 %v823
    %891 = vmatprep.subr.bf16.mxu0 %v822
    %892 = vmatpush2.bf16.msra.mxu0 %v821
    %893 = vmatprep.subr.bf16.mxu0 %v820
    %894 = vmatpush2.bf16.msra.mxu0 %v819
    %895 = vmatprep.subr.bf16.mxu0 %v818
    %896 = vmatpush2.bf16.msra.mxu0 %v817
    %897 = vmatprep.mubr.bf16.mxu0 %v646
    %898 = vmatmul.mubr.bf16.gmra.mxu0 %v645
    %v899 = vpop.f32.mrf.mxu0
    %v900 = vadd.f32 %v698, %v899
    %v901 = vpop.f32.mrf.mxu0
    %v902 = vadd.f32 %v702, %v901
    %v903 = vpop.f32.mrf.mxu0
    %v904 = vadd.f32 %v698, %v903
    %v905 = vpop.f32.mrf.mxu0
    %v906 = vadd.f32 %v702, %v905
    %907 = vmatprep.mubr.bf16.mxu0 %v648
    %908 = vmatmul.mubr.bf16.gmra.mxu0 %v647
    %v909 = vpop.f32.mrf.mxu0
    %v910 = vadd.f32 %v698, %v909
    %v911 = vpop.f32.mrf.mxu0
    %v912 = vadd.f32 %v702, %v911
    %v913 = vpop.f32.mrf.mxu0
    %v914 = vadd.f32 %v698, %v913
    %v915 = vpop.f32.mrf.mxu0
    %v916 = vadd.f32 %v702, %v915
    %917 = vmatprep.mubr.bf16.mxu0 %v650
    %918 = vmatmul.mubr.bf16.gmra.mxu0 %v649
    %v919 = vpop.f32.mrf.mxu0
    %v920 = vadd.f32 %v698, %v919
    %v921 = vpop.f32.mrf.mxu0
    %v922 = vadd.f32 %v702, %v921
    %v923 = vpop.f32.mrf.mxu0
    %v924 = vadd.f32 %v698, %v923
    %v925 = vpop.f32.mrf.mxu0
    %v926 = vadd.f32 %v702, %v925
    %927 = vmatprep.mubr.bf16.mxu0 %v652
    %928 = vmatmul.mubr.bf16.gmra.mxu0 %v651
    %v929 = vpop.f32.mrf.mxu0
    %v930 = vadd.f32 %v698, %v929
    %v931 = vpop.f32.mrf.mxu0
    %v932 = vadd.f32 %v702, %v931
    %v933 = vpop.f32.mrf.mxu0
    %v934 = vadd.f32 %v698, %v933
    %v935 = vpop.f32.mrf.mxu0
    %v936 = vadd.f32 %v702, %v935
    %937 = vmatprep.mubr.bf16.mxu0 %v654
    %938 = vmatmul.mubr.bf16.gmra.mxu0 %v653
    %v939 = vpop.f32.mrf.mxu0
    %v940 = vadd.f32 %v698, %v939
    %v941 = vpop.f32.mrf.mxu0
    %v942 = vadd.f32 %v702, %v941
    %v943 = vpop.f32.mrf.mxu0
    %v944 = vadd.f32 %v698, %v943
    %v945 = vpop.f32.mrf.mxu0
    %v946 = vadd.f32 %v702, %v945
    %947 = vmatprep.mubr.bf16.mxu0 %v656
    %948 = vmatmul.mubr.bf16.gmra.mxu0 %v655
    %v949 = vpop.f32.mrf.mxu0
    %v950 = vadd.f32 %v698, %v949
    %v951 = vpop.f32.mrf.mxu0
    %v952 = vadd.f32 %v702, %v951
    %v953 = vpop.f32.mrf.mxu0
    %v954 = vadd.f32 %v698, %v953
    %v955 = vpop.f32.mrf.mxu0
    %v956 = vadd.f32 %v702, %v955
    %957 = vmatprep.mubr.bf16.mxu0 %v658
    %958 = vmatmul.mubr.bf16.gmra.mxu0 %v657
    %v959 = vpop.f32.mrf.mxu0
    %v960 = vadd.f32 %v698, %v959
    %v961 = vpop.f32.mrf.mxu0
    %v962 = vadd.f32 %v702, %v961
    %v963 = vpop.f32.mrf.mxu0
    %v964 = vadd.f32 %v698, %v963
    %v965 = vpop.f32.mrf.mxu0
    %v966 = vadd.f32 %v702, %v965
    %967 = vmatprep.mubr.bf16.mxu0 %v660
    %968 = vmatmul.mubr.bf16.gmra.mxu0 %v659
    %v969 = vpop.f32.mrf.mxu0
    %v970 = vadd.f32 %v698, %v969
    %v971 = vpop.f32.mrf.mxu0
    %v972 = vadd.f32 %v702, %v971
    %v973 = vpop.f32.mrf.mxu0
    %v974 = vadd.f32 %v698, %v973
    %v975 = vpop.f32.mrf.mxu0
    %v976 = vadd.f32 %v702, %v975
    %977 = vdwg.mxu0
    %v978 = vmax.f32 %v900, 0.0
    %v979 = vmax.f32 %v902, 0.0
    %v980 = vmax.f32 %v904, 0.0
    %v981 = vmax.f32 %v906, 0.0
    %v982 = vmax.f32 %v910, 0.0
    %v983 = vmax.f32 %v912, 0.0
    %v984 = vmax.f32 %v914, 0.0
    %v985 = vmax.f32 %v916, 0.0
    %v986 = vmax.f32 %v920, 0.0
    %v987 = vmax.f32 %v922, 0.0
    %v988 = vmax.f32 %v924, 0.0
    %v989 = vmax.f32 %v926, 0.0
    %v990 = vmax.f32 %v930, 0.0
    %v991 = vmax.f32 %v932, 0.0
    %v992 = vmax.f32 %v934, 0.0
    %v993 = vmax.f32 %v936, 0.0
    %v994 = vmax.f32 %v940, 0.0
    %v995 = vmax.f32 %v942, 0.0
    %v996 = vmax.f32 %v944, 0.0
    %v997 = vmax.f32 %v946, 0.0
    %v998 = vmax.f32 %v950, 0.0
    %v999 = vmax.f32 %v952, 0.0
    %v1000 = vmax.f32 %v954, 0.0
    %v1001 = vmax.f32 %v956, 0.0
    %v1002 = vmax.f32 %v960, 0.0
    %v1003 = vmax.f32 %v962, 0.0
    %v1004 = vmax.f32 %v964, 0.0
    %v1005 = vmax.f32 %v966, 0.0
    %v1006 = vmax.f32 %v970, 0.0
    %v1007 = vmax.f32 %v972, 0.0
    %v1008 = vmax.f32 %v974, 0.0
    %v1009 = vmax.f32 %v976, 0.0
    %v1010 = vpack.c.bf16 %v980, %v978
    %v1011 = vpack.c.bf16 %v981, %v979
    %v1012 = vpack.c.bf16 %v984, %v982
    %v1013 = vpack.c.bf16 %v985, %v983
    %v1014 = vpack.c.bf16 %v988, %v986
    %v1015 = vpack.c.bf16 %v989, %v987
    %v1016 = vpack.c.bf16 %v992, %v990
    %v1017 = vpack.c.bf16 %v993, %v991
    %v1018 = vpack.c.bf16 %v996, %v994
    %v1019 = vpack.c.bf16 %v997, %v995
    %v1020 = vpack.c.bf16 %v1000, %v998
    %v1021 = vpack.c.bf16 %v1001, %v999
    %v1022 = vpack.c.bf16 %v1004, %v1002
    %v1023 = vpack.c.bf16 %v1005, %v1003
    %v1024 = vpack.c.bf16 %v1008, %v1006
    %v1025 = vpack.c.bf16 %v1009, %v1007
    %v1026 = vld [vmem:[#allocation7] sm:$0xf]
    %v1027 = vld [vmem:[#allocation7 + $0x4] sm:$0xf]
    %v1028 = vld [vmem:[#allocation7 + $0x8] sm:$0xf]
    %v1029 = vld [vmem:[#allocation7 + $0xc] sm:$0xf]
    %v1030 = vld [vmem:[#allocation7 + $0x10] sm:$0xf]
    %v1031 = vld [vmem:[#allocation7 + $0x14] sm:$0xf]
    %v1032 = vld [vmem:[#allocation7 + $0x18] sm:$0xf]
    %v1033 = vld [vmem:[#allocation7 + $0x1c] sm:$0xf]
    %v1034 = vld [vmem:[#allocation7 + $0x20] sm:$0xf]
    %v1035 = vld [vmem:[#allocation7 + $0x24] sm:$0xf]
    %v1036 = vld [vmem:[#allocation7 + $0x28] sm:$0xf]
    %v1037 = vld [vmem:[#allocation7 + $0x2c] sm:$0xf]
    %v1038 = vld [vmem:[#allocation7 + $0x30] sm:$0xf]
    %v1039 = vld [vmem:[#allocation7 + $0x34] sm:$0xf]
    %v1040 = vld [vmem:[#allocation7 + $0x38] sm:$0xf]
    %v1041 = vld [vmem:[#allocation7 + $0x3c] sm:$0xf]
    %v1042 = vld [vmem:[#allocation7 + $0x40] sm:$0xf]
    %v1043 = vld [vmem:[#allocation7 + $0x44] sm:$0xf]
    %v1044 = vld [vmem:[#allocation7 + $0x48] sm:$0xf]
    %v1045 = vld [vmem:[#allocation7 + $0x4c] sm:$0xf]
    %v1046 = vld [vmem:[#allocation7 + $0x50] sm:$0xf]
    %v1047 = vld [vmem:[#allocation7 + $0x54] sm:$0xf]
    %v1048 = vld [vmem:[#allocation7 + $0x58] sm:$0xf]
    %v1049 = vld [vmem:[#allocation7 + $0x5c] sm:$0xf]
    %v1050 = vld [vmem:[#allocation7 + $0x60] sm:$0xf]
    %v1051 = vld [vmem:[#allocation7 + $0x64] sm:$0xf]
    %v1052 = vld [vmem:[#allocation7 + $0x68] sm:$0xf]
    %v1053 = vld [vmem:[#allocation7 + $0x6c] sm:$0xf]
    %v1054 = vld [vmem:[#allocation7 + $0x70] sm:$0xf]
    %v1055 = vld [vmem:[#allocation7 + $0x74] sm:$0xf]
    %v1056 = vld [vmem:[#allocation7 + $0x78] sm:$0xf]
    %v1057 = vld [vmem:[#allocation7 + $0x7c] sm:$0xf]
    %v1058 = vld [vmem:[%s9] sm:$0x1]
    %v1060 = vlaneseq
    %v1061 = vshrl.u32 %v1060, 7
    %v1062 = vsub.s32 0, %v1061
    %v1063 = vrot.slane %v1058, %v1062
    %v1097 = vunpack.c.l.b16 %v1026
    %v1098 = vunpack.c.l.b16 %v1027
    %v1099 = vunpack.c.l.b16 %v1028
    %v1100 = vunpack.c.l.b16 %v1029
    %v1101 = vunpack.c.l.b16 %v1030
    %v1102 = vunpack.c.l.b16 %v1031
    %v1103 = vunpack.c.l.b16 %v1032
    %v1104 = vunpack.c.l.b16 %v1033
    %v1105 = vunpack.c.l.b16 %v1034
    %v1106 = vunpack.c.l.b16 %v1035
    %v1107 = vunpack.c.l.b16 %v1036
    %v1108 = vunpack.c.l.b16 %v1037
    %v1109 = vunpack.c.l.b16 %v1038
    %v1110 = vunpack.c.l.b16 %v1039
    %v1111 = vunpack.c.l.b16 %v1040
    %v1112 = vunpack.c.l.b16 %v1041
    %v1113 = vunpack.c.l.b16 %v1042
    %v1114 = vunpack.c.l.b16 %v1043
    %v1115 = vunpack.c.l.b16 %v1044
    %v1116 = vunpack.c.l.b16 %v1045
    %v1117 = vunpack.c.l.b16 %v1046
    %v1118 = vunpack.c.l.b16 %v1047
    %v1119 = vunpack.c.l.b16 %v1048
    %v1120 = vunpack.c.l.b16 %v1049
    %v1121 = vunpack.c.l.b16 %v1050
    %v1122 = vunpack.c.l.b16 %v1051
    %v1123 = vunpack.c.l.b16 %v1052
    %v1124 = vunpack.c.l.b16 %v1053
    %v1125 = vunpack.c.l.b16 %v1054
    %v1126 = vunpack.c.l.b16 %v1055
    %v1127 = vunpack.c.l.b16 %v1056
    %v1128 = vunpack.c.l.b16 %v1057
    %v1129 = vpack.c.b16 %v1098, %v1097
    %v1130 = vpack.c.b16 %v1100, %v1099
    %v1131 = vpack.c.b16 %v1102, %v1101
    %v1132 = vpack.c.b16 %v1104, %v1103
    %v1133 = vpack.c.b16 %v1106, %v1105
    %v1134 = vpack.c.b16 %v1108, %v1107
    %v1135 = vpack.c.b16 %v1110, %v1109
    %v1136 = vpack.c.b16 %v1112, %v1111
    %v1137 = vpack.c.b16 %v1114, %v1113
    %v1138 = vpack.c.b16 %v1116, %v1115
    %v1139 = vpack.c.b16 %v1118, %v1117
    %v1140 = vpack.c.b16 %v1120, %v1119
    %v1141 = vpack.c.b16 %v1122, %v1121
    %v1142 = vpack.c.b16 %v1124, %v1123
    %v1143 = vpack.c.b16 %v1126, %v1125
    %v1144 = vpack.c.b16 %v1128, %v1127
    %1161 = vmatprep.subr.bf16.mxu0 0
    %1162 = vmatpush1.bf16.msra.mxu0 %v1136
    %1163 = vmatprep.subr.bf16.mxu0 0
    %1164 = vmatpush1.bf16.msra.mxu0 %v1135
    %1165 = vmatprep.subr.bf16.mxu0 0
    %1166 = vmatpush1.bf16.msra.mxu0 %v1134
    %1167 = vmatprep.subr.bf16.mxu0 0
    %1168 = vmatpush1.bf16.msra.mxu0 %v1133
    %1169 = vmatprep.subr.bf16.mxu0 0
    %1170 = vmatpush1.bf16.msra.mxu0 %v1132
    %1171 = vmatprep.subr.bf16.mxu0 0
    %1172 = vmatpush1.bf16.msra.mxu0 %v1131
    %1173 = vmatprep.subr.bf16.mxu0 0
    %1174 = vmatpush1.bf16.msra.mxu0 %v1130
    %1175 = vmatprep.subr.bf16.mxu0 0
    %1176 = vmatpush1.bf16.msra.mxu0 %v1129
    %1177 = vmatprep.subr.bf16.mxu0 0
    %1178 = vmatpush2.bf16.msra.mxu0 %v1144
    %1179 = vmatprep.subr.bf16.mxu0 0
    %1180 = vmatpush2.bf16.msra.mxu0 %v1143
    %1181 = vmatprep.subr.bf16.mxu0 0
    %1182 = vmatpush2.bf16.msra.mxu0 %v1142
    %1183 = vmatprep.subr.bf16.mxu0 0
    %1184 = vmatpush2.bf16.msra.mxu0 %v1141
    %1185 = vmatprep.subr.bf16.mxu0 0
    %1186 = vmatpush2.bf16.msra.mxu0 %v1140
    %1187 = vmatprep.subr.bf16.mxu0 0
    %1188 = vmatpush2.bf16.msra.mxu0 %v1139
    %1189 = vmatprep.subr.bf16.mxu0 0
    %1190 = vmatpush2.bf16.msra.mxu0 %v1138
    %1191 = vmatprep.subr.bf16.mxu0 0
    %1192 = vmatpush2.bf16.msra.mxu0 %v1137
    %1193 = vmatprep.mubr.bf16.mxu0 %v1011
    %1194 = vmatmul.mubr.bf16.gmra.mxu0 %v1010
    %v1195 = vpop.f32.mrf.mxu0
    %v1196 = vadd.f32 %v1063, %v1195
    %v1197 = vpop.f32.mrf.mxu0
    %v1198 = vpop.f32.mrf.mxu0
    %v1199 = vadd.f32 %v1063, %v1198
    %v1200 = vpop.f32.mrf.mxu0
    %1201 = vmatprep.mubr.bf16.mxu0 %v1013
    %1202 = vmatmul.mubr.bf16.gmra.mxu0 %v1012
    %v1203 = vpop.f32.mrf.mxu0
    %v1204 = vadd.f32 %v1063, %v1203
    %v1205 = vpop.f32.mrf.mxu0
    %v1206 = vpop.f32.mrf.mxu0
    %v1207 = vadd.f32 %v1063, %v1206
    %v1208 = vpop.f32.mrf.mxu0
    %1209 = vmatprep.mubr.bf16.mxu0 %v1015
    %1210 = vmatmul.mubr.bf16.gmra.mxu0 %v1014
    %v1211 = vpop.f32.mrf.mxu0
    %v1212 = vadd.f32 %v1063, %v1211
    %v1213 = vpop.f32.mrf.mxu0
    %v1214 = vpop.f32.mrf.mxu0
    %v1215 = vadd.f32 %v1063, %v1214
    %v1216 = vpop.f32.mrf.mxu0
    %1217 = vmatprep.mubr.bf16.mxu0 %v1017
    %1218 = vmatmul.mubr.bf16.gmra.mxu0 %v1016
    %v1219 = vpop.f32.mrf.mxu0
    %v1220 = vadd.f32 %v1063, %v1219
    %v1221 = vpop.f32.mrf.mxu0
    %v1222 = vpop.f32.mrf.mxu0
    %v1223 = vadd.f32 %v1063, %v1222
    %v1224 = vpop.f32.mrf.mxu0
    %1225 = vmatprep.mubr.bf16.mxu0 %v1019
    %1226 = vmatmul.mubr.bf16.gmra.mxu0 %v1018
    %v1227 = vpop.f32.mrf.mxu0
    %v1228 = vadd.f32 %v1063, %v1227
    %v1229 = vpop.f32.mrf.mxu0
    %v1230 = vpop.f32.mrf.mxu0
    %v1231 = vadd.f32 %v1063, %v1230
    %v1232 = vpop.f32.mrf.mxu0
    %1233 = vmatprep.mubr.bf16.mxu0 %v1021
    %1234 = vmatmul.mubr.bf16.gmra.mxu0 %v1020
    %v1235 = vpop.f32.mrf.mxu0
    %v1236 = vadd.f32 %v1063, %v1235
    %v1237 = vpop.f32.mrf.mxu0
    %v1238 = vpop.f32.mrf.mxu0
    %v1239 = vadd.f32 %v1063, %v1238
    %v1240 = vpop.f32.mrf.mxu0
    %1241 = vmatprep.mubr.bf16.mxu0 %v1023
    %1242 = vmatmul.mubr.bf16.gmra.mxu0 %v1022
    %v1243 = vpop.f32.mrf.mxu0
    %v1244 = vadd.f32 %v1063, %v1243
    %v1245 = vpop.f32.mrf.mxu0
    %v1246 = vpop.f32.mrf.mxu0
    %v1247 = vadd.f32 %v1063, %v1246
    %v1248 = vpop.f32.mrf.mxu0
    %1249 = vmatprep.mubr.bf16.mxu0 %v1025
    %1250 = vmatmul.mubr.bf16.gmra.mxu0 %v1024
    %v1251 = vpop.f32.mrf.mxu0
    %v1252 = vadd.f32 %v1063, %v1251
    %v1253 = vpop.f32.mrf.mxu0
    %v1254 = vpop.f32.mrf.mxu0
    %v1255 = vadd.f32 %v1063, %v1254
    %v1256 = vpop.f32.mrf.mxu0
    %1257 = vdwg.mxu0
    %v1258 = vmax.f32 %v1196, 0.0
    %v1259 = vmax.f32 %v1199, 0.0
    %v1260 = vmax.f32 %v1204, 0.0
    %v1261 = vmax.f32 %v1207, 0.0
    %v1262 = vmax.f32 %v1212, 0.0
    %v1263 = vmax.f32 %v1215, 0.0
    %v1264 = vmax.f32 %v1220, 0.0
    %v1265 = vmax.f32 %v1223, 0.0
    %v1266 = vmax.f32 %v1228, 0.0
    %v1267 = vmax.f32 %v1231, 0.0
    %v1268 = vmax.f32 %v1236, 0.0
    %v1269 = vmax.f32 %v1239, 0.0
    %v1270 = vmax.f32 %v1244, 0.0
    %v1271 = vmax.f32 %v1247, 0.0
    %v1272 = vmax.f32 %v1252, 0.0
    %v1273 = vmax.f32 %v1255, 0.0
    %v1274 = vpack.c.bf16 %v1259, %v1258
    %v1275 = vpack.c.bf16 %v1261, %v1260
    %v1276 = vpack.c.bf16 %v1263, %v1262
    %v1277 = vpack.c.bf16 %v1265, %v1264
    %v1278 = vpack.c.bf16 %v1267, %v1266
    %v1279 = vpack.c.bf16 %v1269, %v1268
    %v1280 = vpack.c.bf16 %v1271, %v1270
    %v1281 = vpack.c.bf16 %v1273, %v1272
    %v1282 = vld [vmem:[#allocation8] sm:$0xf]
    %v1283 = vld [vmem:[#allocation8 + $0x4] sm:$0xf]
    %v1284 = vld [vmem:[#allocation8 + $0x8] sm:$0xf]
    %v1285 = vld [vmem:[#allocation8 + $0xc] sm:$0xf]
    %v1286 = vld [vmem:[#allocation8 + $0x10] sm:$0xf]
    %v1287 = vld [vmem:[#allocation8 + $0x14] sm:$0xf]
    %v1288 = vld [vmem:[#allocation8 + $0x18] sm:$0xf]
    %v1289 = vld [vmem:[#allocation8 + $0x1c] sm:$0xf]
    %v1290 = vld [vmem:[#allocation8 + $0x20] sm:$0xf]
    %v1291 = vld [vmem:[#allocation8 + $0x24] sm:$0xf]
    %v1292 = vld [vmem:[#allocation8 + $0x28] sm:$0xf]
    %v1293 = vld [vmem:[#allocation8 + $0x2c] sm:$0xf]
    %v1294 = vld [vmem:[#allocation8 + $0x30] sm:$0xf]
    %v1295 = vld [vmem:[#allocation8 + $0x34] sm:$0xf]
    %v1296 = vld [vmem:[#allocation8 + $0x38] sm:$0xf]
    %v1297 = vld [vmem:[#allocation8 + $0x3c] sm:$0xf]
    %v1298 = vld [vmem:[%s11] sm:$0x1]
    %v1300 = vlaneseq
    %v1301 = vshrl.u32 %v1300, 7
    %v1302 = vsub.s32 0, %v1301
    %v1303 = vrot.slane %v1298, %v1302
    %v1321 = vunpack.c.l.b16 %v1282
    %v1322 = vunpack.c.l.b16 %v1283
    %v1323 = vunpack.c.l.b16 %v1284
    %v1324 = vunpack.c.l.b16 %v1285
    %v1325 = vunpack.c.l.b16 %v1286
    %v1326 = vunpack.c.l.b16 %v1287
    %v1327 = vunpack.c.l.b16 %v1288
    %v1328 = vunpack.c.l.b16 %v1289
    %v1329 = vunpack.c.l.b16 %v1290
    %v1330 = vunpack.c.l.b16 %v1291
    %v1331 = vunpack.c.l.b16 %v1292
    %v1332 = vunpack.c.l.b16 %v1293
    %v1333 = vunpack.c.l.b16 %v1294
    %v1334 = vunpack.c.l.b16 %v1295
    %v1335 = vunpack.c.l.b16 %v1296
    %v1336 = vunpack.c.l.b16 %v1297
    %v1337 = vpack.c.b16 %v1322, %v1321
    %v1338 = vpack.c.b16 %v1324, %v1323
    %v1339 = vpack.c.b16 %v1326, %v1325
    %v1340 = vpack.c.b16 %v1328, %v1327
    %v1341 = vpack.c.b16 %v1330, %v1329
    %v1342 = vpack.c.b16 %v1332, %v1331
    %v1343 = vpack.c.b16 %v1334, %v1333
    %v1344 = vpack.c.b16 %v1336, %v1335
    %1353 = vmatprep.subr.bf16.mxu0 0
    %1354 = vmatpush1.bf16.msra.mxu0 %v1344
    %1355 = vmatprep.subr.bf16.mxu0 0
    %1356 = vmatpush1.bf16.msra.mxu0 %v1343
    %1357 = vmatprep.subr.bf16.mxu0 0
    %1358 = vmatpush1.bf16.msra.mxu0 %v1342
    %1359 = vmatprep.subr.bf16.mxu0 0
    %1360 = vmatpush1.bf16.msra.mxu0 %v1341
    %1361 = vmatprep.subr.bf16.mxu0 0
    %1362 = vmatpush1.bf16.msra.mxu0 %v1340
    %1363 = vmatprep.subr.bf16.mxu0 0
    %1364 = vmatpush1.bf16.msra.mxu0 %v1339
    %1365 = vmatprep.subr.bf16.mxu0 0
    %1366 = vmatpush1.bf16.msra.mxu0 %v1338
    %1367 = vmatprep.subr.bf16.mxu0 0
    %1368 = vmatpush1.bf16.msra.mxu0 %v1337
    %1369 = vmatprep.subr.bf16.mxu0 0
    %1370 = vmatpush2.bf16.msra.mxu0 0
    %1371 = vmatprep.subr.bf16.mxu0 0
    %1372 = vmatpush2.bf16.msra.mxu0 0
    %1373 = vmatprep.subr.bf16.mxu0 0
    %1374 = vmatpush2.bf16.msra.mxu0 0
    %1375 = vmatprep.subr.bf16.mxu0 0
    %1376 = vmatpush2.bf16.msra.mxu0 0
    %1377 = vmatprep.subr.bf16.mxu0 0
    %1378 = vmatpush2.bf16.msra.mxu0 0
    %1379 = vmatprep.subr.bf16.mxu0 0
    %1380 = vmatpush2.bf16.msra.mxu0 0
    %1381 = vmatprep.subr.bf16.mxu0 0
    %1382 = vmatpush2.bf16.msra.mxu0 0
    %1383 = vmatprep.subr.bf16.mxu0 0
    %1384 = vmatpush2.bf16.msra.mxu0 0
    %1385 = vmatprep.mubr.bf16.mxu0 0
    %1386 = vmatmul.mubr.bf16.gmra.mxu0 %v1274
    %v1387 = vpop.f32.mrf.mxu0
    %v1388 = vadd.f32 %v1303, %v1387
    %v1389 = vpop.f32.mrf.mxu0
    %v1390 = vpop.f32.mrf.mxu0
    %v1391 = vadd.f32 %v1303, %v1390
    %v1392 = vpop.f32.mrf.mxu0
    %1393 = vmatprep.mubr.bf16.mxu0 0
    %1394 = vmatmul.mubr.bf16.gmra.mxu0 %v1275
    %v1395 = vpop.f32.mrf.mxu0
    %v1396 = vadd.f32 %v1303, %v1395
    %v1397 = vpop.f32.mrf.mxu0
    %v1398 = vpop.f32.mrf.mxu0
    %v1399 = vadd.f32 %v1303, %v1398
    %v1400 = vpop.f32.mrf.mxu0
    %1401 = vmatprep.mubr.bf16.mxu0 0
    %1402 = vmatmul.mubr.bf16.gmra.mxu0 %v1276
    %v1403 = vpop.f32.mrf.mxu0
    %v1404 = vadd.f32 %v1303, %v1403
    %v1405 = vpop.f32.mrf.mxu0
    %v1406 = vpop.f32.mrf.mxu0
    %v1407 = vadd.f32 %v1303, %v1406
    %v1408 = vpop.f32.mrf.mxu0
    %1409 = vmatprep.mubr.bf16.mxu0 0
    %1410 = vmatmul.mubr.bf16.gmra.mxu0 %v1277
    %v1411 = vpop.f32.mrf.mxu0
    %v1412 = vadd.f32 %v1303, %v1411
    %v1413 = vpop.f32.mrf.mxu0
    %v1414 = vpop.f32.mrf.mxu0
    %v1415 = vadd.f32 %v1303, %v1414
    %v1416 = vpop.f32.mrf.mxu0
    %1417 = vmatprep.mubr.bf16.mxu0 0
    %1418 = vmatmul.mubr.bf16.gmra.mxu0 %v1278
    %v1419 = vpop.f32.mrf.mxu0
    %v1420 = vadd.f32 %v1303, %v1419
    %v1421 = vpop.f32.mrf.mxu0
    %v1422 = vpop.f32.mrf.mxu0
    %v1423 = vadd.f32 %v1303, %v1422
    %v1424 = vpop.f32.mrf.mxu0
    %1425 = vmatprep.mubr.bf16.mxu0 0
    %1426 = vmatmul.mubr.bf16.gmra.mxu0 %v1279
    %v1427 = vpop.f32.mrf.mxu0
    %v1428 = vadd.f32 %v1303, %v1427
    %v1429 = vpop.f32.mrf.mxu0
    %v1430 = vpop.f32.mrf.mxu0
    %v1431 = vadd.f32 %v1303, %v1430
    %v1432 = vpop.f32.mrf.mxu0
    %1433 = vmatprep.mubr.bf16.mxu0 0
    %1434 = vmatmul.mubr.bf16.gmra.mxu0 %v1280
    %v1435 = vpop.f32.mrf.mxu0
    %v1436 = vadd.f32 %v1303, %v1435
    %v1437 = vpop.f32.mrf.mxu0
    %v1438 = vpop.f32.mrf.mxu0
    %v1439 = vadd.f32 %v1303, %v1438
    %v1440 = vpop.f32.mrf.mxu0
    %1441 = vmatprep.mubr.bf16.mxu0 0
    %1442 = vmatmul.mubr.bf16.gmra.mxu0 %v1281
    %v1443 = vpop.f32.mrf.mxu0
    %v1444 = vadd.f32 %v1303, %v1443
    %v1445 = vpop.f32.mrf.mxu0
    %v1446 = vpop.f32.mrf.mxu0
    %v1447 = vadd.f32 %v1303, %v1446
    %v1448 = vpop.f32.mrf.mxu0
    %1449 = vdwg.mxu0
    %1450 = vst [vmem:[#allocation10] sm:$0xff] %v1388
    %1451 = vst [vmem:[#allocation10 + $0x8] sm:$0xff] %v1391
    %1452 = vst [vmem:[#allocation10 + $0x10] sm:$0xff] %v1396
    %1453 = vst [vmem:[#allocation10 + $0x18] sm:$0xff] %v1399
    %1454 = vst [vmem:[#allocation10 + $0x20] sm:$0xff] %v1404
    %1455 = vst [vmem:[#allocation10 + $0x28] sm:$0xff] %v1407
    %1456 = vst [vmem:[#allocation10 + $0x30] sm:$0xff] %v1412
    %1457 = vst [vmem:[#allocation10 + $0x38] sm:$0xff] %v1415
    %1458 = vst [vmem:[#allocation10 + $0x40] sm:$0xff] %v1420
    %1459 = vst [vmem:[#allocation10 + $0x48] sm:$0xff] %v1423
    %1460 = vst [vmem:[#allocation10 + $0x50] sm:$0xff] %v1428
    %1461 = vst [vmem:[#allocation10 + $0x58] sm:$0xff] %v1431
    %1462 = vst [vmem:[#allocation10 + $0x60] sm:$0xff] %v1436
    %1463 = vst [vmem:[#allocation10 + $0x68] sm:$0xff] %v1439
    %1464 = vst [vmem:[#allocation10 + $0x70] sm:$0xff] %v1444
    %1465 = vst [vmem:[#allocation10 + $0x78] sm:$0xff] %v1447
    // Predicated region
    $region66: #{tpu_custom_call.1} parent=1 // pred_check
      _
    $region67: #{tpu_custom_call.1} parent=1 // pred_check_branch
      %1467 = sbr.rel (0) target = $region69
    $region68: #{tpu_custom_call.1} parent=1 // pred_region
      %s1469 = ssub.s32 2048, 2048
      %1470 = vsyncadd [#allocation4], %s1469
      %s1471 = sshll.u32 [#allocation10], 4
      %s1472 = int_to_ptr.vmem [resolvable:$true] %s1471
      %1477 = dma.vmem_to_hbm [thread:$0]  %s1472, 2048, %s12, [#allocation4], 128, 128, 8
    $region69: #{tpu_custom_call.1} parent=1 // pred_fallthru
      _
    // Predicated region
    $region70: #{tpu_custom_call.1} parent=1 // pred_check
      _
    $region71: #{tpu_custom_call.1} parent=1 // pred_check_branch
      %1479 = sbr.rel (0) target = $region73
    $region72: #{tpu_custom_call.1} parent=1 // pred_region
      %1480 = dma.done [#allocation4], 2048
    $region73: #{tpu_custom_call.1} parent=1 // pred_fallthru
      _
    %1481 = vsyncpa [#allocation3], 1
    %1482 = vsyncpa [#allocation6], 1
    %1483 = vsyncpa [#allocation9], 1
    %1484 = vsyncpa [#allocation4], 1

</llo_original>
